<compile_context>
chip_gen: v5e
topology: v5e:2x2
jax: 0.10.0
libtpu: 0.0.40
codegen_flags: <defaults>
</compile_context>

<pallas_src>
from functools import partial

import jax
import jax.numpy as jnp
from jax import lax
from jax.experimental import pallas as pl
from jax.experimental.pallas import tpu as pltpu

BN_EPS = 1e-5
PADF = 128   # flat halo / inter-image gap width (one lane tile); must be >= W+1


def _residual_kernel(x_ref, w1_ref, b1_ref, w2_ref, b2_ref, m_ref, *rest,
                     Cin, Cout, Cp, H, W, B, has_proj, use_im2col):
    # x_ref   : (B, Cin, H*W)   bf16  B input images, spatial flattened
    # w1_ref  : (9, Cout, Cp)   bf16  conv1 weights * BN1 scale [per-tap path]
    #           (Cout, 9*Cp)    bf16  tap-major im2col layout   [im2col path]
    # b1_ref  : (Cout, 1)       f32   folded BN1 bias (incl. conv bias)
    # w2_ref / b2_ref : same for conv2 / BN2
    # m_ref   : (2, L)          f32   dx-wrap masks (row0: dx=-1, row1: dx=+1)
    # [ws_ref : (Cout, Cin)     bf16  1x1 shortcut weights (only if has_proj)]
    # [bs_ref : (Cout, 1)       f32   shortcut bias        (only if has_proj)]
    # out_ref : (B, Cout, H*W)  f32
    # xpad_ref: (Cp, PADF + B*(H*W+PADF)) bf16  flat-padded activation scratch
    # [col_ref: (9*Cp, L)       bf16  im2col scratch (only if use_im2col)]
    if has_proj:
        ws_ref, bs_ref = rest[0], rest[1]
        rest = rest[2:]
    if use_im2col:
        out_ref, xpad_ref, col_ref = rest
    else:
        out_ref, xpad_ref = rest

    HW = H * W
    STRIDE = HW + PADF                 # per-image slab stride inside xpad
    L = (B - 1) * STRIDE + HW          # matmul N extent spanning all B images
    TOT = PADF + B * STRIDE

    # Zero the whole scratch every step: covers the halos, the inter-image
    # gaps and the padded channel rows.  Done per step (not once) so the
    # kernel stays correct when the batch axis is sharded across TensorCores
    # ("parallel"): each core owns a private, initially-uninitialised scratch.
    xpad_ref[...] = jnp.zeros((Cp, TOT), jnp.bfloat16)

    m_left = m_ref[0:1, :].astype(jnp.bfloat16)    # 0 where the dx=-1 tap wraps
    m_right = m_ref[1:2, :].astype(jnp.bfloat16)   # 0 where the dx=+1 tap wraps

    def conv3x3(w_ref):
        # Each tap (dy, dx) is a plain lane-offset slice of the flat-padded
        # scratch; rows that run off an image land in the zero halo / gaps and
        # only the dx = +/-1 taps need the wrap mask.
        acc = None
        for dy in range(3):
            for dx in range(3):
                off = PADF + (dy - 1) * W + (dx - 1)
                t = xpad_ref[:, off:off + L]                      # (Cp, L) bf16
                if dx == 0:
                    t = t * m_left
                elif dx == 2:
                    t = t * m_right
                tap = dy * 3 + dx
                if use_im2col:
                    col_ref[tap * Cp:(tap + 1) * Cp, :] = t
                else:
                    d = jnp.dot(w_ref[tap], t,
                                preferred_element_type=jnp.float32)
                    acc = d if acc is None else acc + d
        if use_im2col:
            # Single deep-K MXU pass: (Cout, 9*Cp) x (9*Cp, L), f32 accumulate.
            acc = jnp.dot(w_ref[...], col_ref[...],
                          preferred_element_type=jnp.float32)
        return acc                                                # (Cout, L) f32

    # ---- conv1 (3x3, pad=1); BN1 scale folded into w1, bias + ReLU ----
    for b in range(B):
        base = PADF + b * STRIDE
        xpad_ref[0:Cin, base:base + HW] = x_ref[b]
    y1 = jnp.maximum(conv3x3(w1_ref) + b1_ref[...], 0.0)          # (Cout, L) f32

    # ---- conv2 (3x3, pad=1): write per-image chunks back (gaps stay zero) ----
    for b in range(B):
        base = PADF + b * STRIDE
        xpad_ref[0:Cout, base:base + HW] = (
            y1[:, b * STRIDE:b * STRIDE + HW].astype(jnp.bfloat16))
    res = conv3x3(w2_ref) + b2_ref[...]                           # (Cout, L) f32

    # ---- shortcut (1x1 projection or identity) + final ReLU, per image ----
    for b in range(B):
        if has_proj:
            sc = jnp.dot(ws_ref[...], x_ref[b],
                         preferred_element_type=jnp.float32) + bs_ref[...]
        else:
            sc = x_ref[b].astype(jnp.float32)
        r = res[:, b * STRIDE:b * STRIDE + HW]
        out_ref[b] = jnp.maximum(r + sc, 0.0)


def init_params(key, cin, cout):
    ks = jax.random.split(key, 14)
    p = {}
    p['w1'] = 0.1 * jax.random.normal(ks[0], (3, 3, cin, cout), jnp.float32)
    p['cb1'] = 0.1 * jax.random.normal(ks[1], (cout,), jnp.float32)
    p['g1'] = 1.0 + 0.1 * jax.random.normal(ks[2], (cout,), jnp.float32)
    p['be1'] = 0.1 * jax.random.normal(ks[3], (cout,), jnp.float32)
    p['m1'] = 0.1 * jax.random.normal(ks[4], (cout,), jnp.float32)
    p['v1'] = 1.0 + 0.1 * jnp.abs(jax.random.normal(ks[5], (cout,), jnp.float32))
    p['w2'] = 0.1 * jax.random.normal(ks[6], (3, 3, cout, cout), jnp.float32)
    p['cb2'] = 0.1 * jax.random.normal(ks[7], (cout,), jnp.float32)
    p['g2'] = 1.0 + 0.1 * jax.random.normal(ks[8], (cout,), jnp.float32)
    p['be2'] = 0.1 * jax.random.normal(ks[9], (cout,), jnp.float32)
    p['m2'] = 0.1 * jax.random.normal(ks[10], (cout,), jnp.float32)
    p['v2'] = 1.0 + 0.1 * jnp.abs(jax.random.normal(ks[11], (cout,), jnp.float32))
    if cin != cout:
        p['ws'] = 0.1 * jax.random.normal(ks[12], (cin, cout), jnp.float32)
        p['bs'] = 0.1 * jax.random.normal(ks[13], (cout,), jnp.float32)
    return p


def _fold_bn(p):
    s1 = p['g1'] / jnp.sqrt(p['v1'] + BN_EPS)
    b1 = (p['cb1'] - p['m1']) * s1 + p['be1']
    s2 = p['g2'] / jnp.sqrt(p['v2'] + BN_EPS)
    b2 = (p['cb2'] - p['m2']) * s2 + p['be2']
    return s1, b1, s2, b2


def _ceil_to(a, m):
    return (a + m - 1) // m * m


def _pick_batch_block(n):
    # Largest power-of-two divisor of n that still leaves >= 2 grid steps, so
    # both v7x TensorCores get work under the "parallel" batch axis.
    for b in (8, 4, 2):
        if n % b == 0 and n // b >= 2:
            return b
    return 1


def residual_pallas(x_nchw, p, batch_block=None):
    N, Cin, H, W = x_nchw.shape
    Cout = p['w1'].shape[-1]
    HW = H * W
    assert W + 1 <= PADF, "image width too large for the flat halo"
    B = _pick_batch_block(N) if batch_block is None else batch_block
    assert N % B == 0, "batch block must divide the batch size"
    STRIDE = HW + PADF
    L = (B - 1) * STRIDE + HW

    # Per-tap channel block, multiple of 16 so bf16 sublane-packed scratch
    # stores stay unmasked (weights are zero-padded to the same Cp).
    Cp = max(_ceil_to(Cin, 16), _ceil_to(Cout, 16))
    # ResNet-scale channels -> per-tap accumulating matmuls (no im2col
    # materialisation); small Cp -> one deep-K matmul keeps the MXU K filled.
    use_im2col = Cp < 128

    # bf16 activations at the kernel boundary (the MXU consumes bf16 anyway);
    # output stays f32 to match the module's forward dtype.
    xf = x_nchw.astype(jnp.bfloat16).reshape(N, Cin, HW)

    s1, b1, s2, b2 = _fold_bn(p)

    def pack_w(w, cin, scale):
        # HWIO (3,3,cin,Cout): fold the per-output-channel BN scale into the
        # weights, zero-pad input channels to Cp, lay out for the chosen path.
        w = w * scale[None, None, None, :]
        w = jnp.transpose(w, (3, 0, 1, 2))                        # (Cout,3,3,cin)
        w = jnp.pad(w, ((0, 0), (0, 0), (0, 0), (0, Cp - cin)))   # (Cout,3,3,Cp)
        w = w.reshape(Cout, 9, Cp)
        if use_im2col:
            w = w.reshape(Cout, 9 * Cp)        # tap-major K, matches col rows
        else:
            w = jnp.transpose(w, (1, 0, 2))    # (9, Cout, Cp), one slab per tap
        return w.astype(jnp.bfloat16)

    w1m = pack_w(p['w1'], Cin, s1)
    w2m = pack_w(p['w2'], Cout, s2)
    b1 = b1.reshape(Cout, 1).astype(jnp.float32)
    b2 = b2.reshape(Cout, 1).astype(jnp.float32)

    # dx-wrap masks, precomputed once (pattern only varies along the lane axis;
    # also zeroes the inter-image gap columns of the +/-1 taps).
    pos = jnp.arange(L, dtype=jnp.int32)
    pin = pos % STRIDE                    # position inside an image slab
    colp = pin % W
    in_img = pin < HW
    masks = jnp.stack([
        jnp.where((colp > 0) & in_img, 1.0, 0.0),
        jnp.where((colp < W - 1) & in_img, 1.0, 0.0),
    ]).astype(jnp.float32)                                        # (2, L)

    has_proj = 'ws' in p

    def const_spec(shape, buffers=None):
        # Constant index_map: fetched once, never re-DMA'd across the grid.
        idx = lambda n: tuple(0 for _ in shape)
        if buffers is None:
            return pl.BlockSpec(shape, idx)
        # Single-buffered weights: double-buffering a never-changing operand
        # only wastes VMEM (matters most against v7x's 64 MiB).
        return pl.BlockSpec(shape, idx, pipeline_mode=pl.Buffered(buffers))

    inputs = [xf, w1m, b1, w2m, b2, masks]
    in_specs = [
        pl.BlockSpec((B, Cin, HW), lambda n: (n, 0, 0)),
        const_spec(w1m.shape, buffers=1), const_spec((Cout, 1)),
        const_spec(w2m.shape, buffers=1), const_spec((Cout, 1)),
        const_spec((2, L)),
    ]
    if has_proj:
        wsT = jnp.transpose(p['ws']).astype(jnp.bfloat16)         # (Cout, Cin)
        bs = p['bs'].reshape(Cout, 1).astype(jnp.float32)
        inputs += [wsT, bs]
        in_specs += [const_spec((Cout, Cin), buffers=1), const_spec((Cout, 1))]

    scratch = [pltpu.VMEM((Cp, PADF + B * STRIDE), jnp.bfloat16)]  # flat-padded act
    if use_im2col:
        scratch.append(pltpu.VMEM((9 * Cp, L), jnp.bfloat16))      # im2col matrix

    kernel = partial(_residual_kernel, Cin=Cin, Cout=Cout, Cp=Cp, H=H, W=W,
                     B=B, has_proj=has_proj, use_im2col=use_im2col)

    out = pl.pallas_call(
        kernel,
        out_shape=jax.ShapeDtypeStruct((N, Cout, HW), jnp.float32),
        grid_spec=pltpu.PrefetchScalarGridSpec(
            num_scalar_prefetch=0,
            grid=(N // B,),
            in_specs=in_specs,
            out_specs=pl.BlockSpec((B, Cout, HW), lambda n: (n, 0, 0)),
            scratch_shapes=scratch,
        ),
        compiler_params=pltpu.CompilerParams(
            dimension_semantics=("parallel",),
            vmem_limit_bytes=32 * 1024 * 1024),
    )(*inputs)
    return out.reshape(N, Cout, H, W)


def residual_reference(x, p):
    """Pure-JAX reference mirroring the PyTorch forward (eval-mode BN), NCHW."""
    dn = ('NCHW', 'HWIO', 'NCHW')
    conv = lambda a, w: lax.conv_general_dilated(a, w, (1, 1), 'SAME',
                                                 dimension_numbers=dn)

    def bn(a, g, b, m, v):
        return (g[None, :, None, None] * (a - m[None, :, None, None])
                / jnp.sqrt(v[None, :, None, None] + BN_EPS)
                + b[None, :, None, None])

    y = conv(x, p['w1']) + p['cb1'][None, :, None, None]
    y = jax.nn.relu(bn(y, p['g1'], p['be1'], p['m1'], p['v1']))
    y = conv(y, p['w2']) + p['cb2'][None, :, None, None]
    y = bn(y, p['g2'], p['be2'], p['m2'], p['v2'])
    if 'ws' in p:
        sc = jnp.einsum('nchw,cd->ndhw', x, p['ws']) + p['bs'][None, :, None, None]
    else:
        sc = x
    return jax.nn.relu(y + sc)


if __name__ == "__main__":
    key = jax.random.PRNGKey(0)
    kx1, kp1, kx2, kp2, kx3, kp3 = jax.random.split(key, 6)

    def check(out, ref, atol):
        err = jnp.abs(out - ref)
        ok = bool(jnp.all(err <= atol + 5e-2 * jnp.abs(ref)))
        assert ok, float(jnp.max(err))

    # Case 1: channel-expanding residual (1x1-conv shortcut), im2col path, B=1.
    N, Cin, Cout, H, W = 2, 4, 8, 16, 16
    x1 = jax.random.normal(kx1, (N, Cin, H, W), jnp.float32)
    p1 = init_params(kp1, Cin, Cout)
    out1 = jax.block_until_ready(residual_pallas(x1, p1))
    assert out1.shape == (N, Cout, H, W), out1.shape
    check(out1, residual_reference(x1, p1), 5e-2)

    # Case 2: identity shortcut (Cin == Cout) — projection matmul skipped.
    x2 = jax.random.normal(kx2, (N, Cout, H, W), jnp.float32)
    p2 = init_params(kp2, Cout, Cout)
    out2 = jax.block_until_ready(residual_pallas(x2, p2))
    assert out2.shape == (N, Cout, H, W), out2.shape
    check(out2, residual_reference(x2, p2), 5e-2)

    # Case 3: ResNet-ish channel count -> per-tap matmul path, and N=4 so the
    # wrapper batches 2 images per grid step (lane-concatenated).
    N3, C3 = 4, 128
    x3 = jax.random.normal(kx3, (N3, C3, H, W), jnp.float32)
    p3 = init_params(kp3, C3, C3)
    out3 = jax.block_until_ready(residual_pallas(x3, p3))
    assert out3.shape == (N3, C3, H, W), out3.shape
    # Deep-K (9*128) bf16 accumulation -> looser absolute tolerance.
    check(out3, residual_reference(x3, p3), 5e-1)

    print("KERNEL_OK")
</pallas_src>

<mosaic_0001>
module attributes {stable_mosaic.version = 11 : i64} {
  func.func @_residual_kernel(%arg0: i32, %arg1: memref<1x4x256xbf16, #tpu.memory_space<vmem>>, %arg2: memref<8x144xbf16, #tpu.memory_space<vmem>>, %arg3: memref<8x1xf32, #tpu.memory_space<vmem>>, %arg4: memref<8x144xbf16, #tpu.memory_space<vmem>>, %arg5: memref<8x1xf32, #tpu.memory_space<vmem>>, %arg6: memref<2x256xf32, #tpu.memory_space<vmem>>, %arg7: memref<8x4xbf16, #tpu.memory_space<vmem>>, %arg8: memref<8x1xf32, #tpu.memory_space<vmem>>, %arg9: memref<1x8x256xf32, #tpu.memory_space<vmem>>, %arg10: memref<16x512xbf16, #tpu.memory_space<vmem>>, %arg11: memref<144x256xbf16, #tpu.memory_space<vmem>>) attributes {dimension_semantics = [#tpu.dimension_semantics<parallel>], iteration_bounds = array<i64: 2>, scalar_prefetch = 0 : i64, scratch_operands = 2 : i64, tpu.core_type = #tpu.core_type<tc>, window_params = [{transform_indices = @transform_0, window_bounds = array<i64: 1, 4, 256>}, {pipeline_mode = #tpu.pipeline_mode<synchronous>, transform_indices = @transform_1, window_bounds = array<i64: 8, 144>}, {pipeline_mode = #tpu.pipeline_mode<synchronous>, transform_indices = @transform_2, window_bounds = array<i64: 8, 1>}, {pipeline_mode = #tpu.pipeline_mode<synchronous>, transform_indices = @transform_3, window_bounds = array<i64: 8, 144>}, {pipeline_mode = #tpu.pipeline_mode<synchronous>, transform_indices = @transform_4, window_bounds = array<i64: 8, 1>}, {pipeline_mode = #tpu.pipeline_mode<synchronous>, transform_indices = @transform_5, window_bounds = array<i64: 2, 256>}, {pipeline_mode = #tpu.pipeline_mode<synchronous>, transform_indices = @transform_6, window_bounds = array<i64: 8, 4>}, {pipeline_mode = #tpu.pipeline_mode<synchronous>, transform_indices = @transform_7, window_bounds = array<i64: 8, 1>}, {transform_indices = @transform_8, window_bounds = array<i64: 1, 8, 256>}]} {
    %cst = arith.constant 0.000000e+00 : bf16
    %0 = vector.broadcast %cst : bf16 to vector<16x512xbf16>
    %c0 = arith.constant 0 : index
    %c0_0 = arith.constant 0 : index
    %1 = vector.load %arg10[%c0, %c0_0] : memref<16x512xbf16, #tpu.memory_space<vmem>>, vector<16x512xbf16>
    tpu.vector_store %arg10[%c0, %c0_0], %0 {strides = array<i32>} : memref<16x512xbf16, #tpu.memory_space<vmem>>, vector<16x512xbf16>,
    %c0_1 = arith.constant 0 : index
    %c0_2 = arith.constant 0 : index
    %2 = vector.load %arg6[%c0_1, %c0_2] : memref<2x256xf32, #tpu.memory_space<vmem>>, vector<1x256xf32>
    %3 = arith.truncf %2 : vector<1x256xf32> to vector<1x256xbf16>
    %c1 = arith.constant 1 : index
    %c0_3 = arith.constant 0 : index
    %4 = vector.load %arg6[%c1, %c0_3] : memref<2x256xf32, #tpu.memory_space<vmem>>, vector<1x256xf32>
    %5 = arith.truncf %4 : vector<1x256xf32> to vector<1x256xbf16>
    %c0_4 = arith.constant 0 : index
    %c0_5 = arith.constant 0 : index
    %c0_6 = arith.constant 0 : index
    %6 = vector.load %arg1[%c0_4, %c0_5, %c0_6] : memref<1x4x256xbf16, #tpu.memory_space<vmem>>, vector<1x4x256xbf16>
    %7 = vector.shape_cast %6 : vector<1x4x256xbf16> to vector<4x256xbf16>
    %c0_7 = arith.constant 0 : index
    %c128 = arith.constant 128 : index
    %8 = vector.load %arg10[%c0_7, %c128] : memref<16x512xbf16, #tpu.memory_space<vmem>>, vector<4x256xbf16>
    tpu.vector_store %arg10[%c0_7, %c128], %7 {strides = array<i32>} : memref<16x512xbf16, #tpu.memory_space<vmem>>, vector<4x256xbf16>,
    %c0_8 = arith.constant 0 : index
    %c111 = arith.constant 111 : index
    %9 = vector.load %arg10[%c0_8, %c111] : memref<16x512xbf16, #tpu.memory_space<vmem>>, vector<16x256xbf16>
    %10 = vector.broadcast %3 : vector<1x256xbf16> to vector<16x256xbf16>
    %11 = arith.mulf %9, %10 : vector<16x256xbf16>
    %c0_9 = arith.constant 0 : index
    %c0_10 = arith.constant 0 : index
    %12 = vector.load %arg11[%c0_9, %c0_10] : memref<144x256xbf16, #tpu.memory_space<vmem>>, vector<16x256xbf16>
    tpu.vector_store %arg11[%c0_9, %c0_10], %11 {strides = array<i32>} : memref<144x256xbf16, #tpu.memory_space<vmem>>, vector<16x256xbf16>,
    %c0_11 = arith.constant 0 : index
    %c112 = arith.constant 112 : index
    %13 = vector.load %arg10[%c0_11, %c112] : memref<16x512xbf16, #tpu.memory_space<vmem>>, vector<16x256xbf16>
    %c16 = arith.constant 16 : index
    %c0_12 = arith.constant 0 : index
    %14 = vector.load %arg11[%c16, %c0_12] : memref<144x256xbf16, #tpu.memory_space<vmem>>, vector<16x256xbf16>
    tpu.vector_store %arg11[%c16, %c0_12], %13 {strides = array<i32>} : memref<144x256xbf16, #tpu.memory_space<vmem>>, vector<16x256xbf16>,
    %c0_13 = arith.constant 0 : index
    %c113 = arith.constant 113 : index
    %15 = vector.load %arg10[%c0_13, %c113] : memref<16x512xbf16, #tpu.memory_space<vmem>>, vector<16x256xbf16>
    %16 = vector.broadcast %5 : vector<1x256xbf16> to vector<16x256xbf16>
    %17 = arith.mulf %15, %16 : vector<16x256xbf16>
    %c32 = arith.constant 32 : index
    %c0_14 = arith.constant 0 : index
    %18 = vector.load %arg11[%c32, %c0_14] : memref<144x256xbf16, #tpu.memory_space<vmem>>, vector<16x256xbf16>
    tpu.vector_store %arg11[%c32, %c0_14], %17 {strides = array<i32>} : memref<144x256xbf16, #tpu.memory_space<vmem>>, vector<16x256xbf16>,
    %c0_15 = arith.constant 0 : index
    %c127 = arith.constant 127 : index
    %19 = vector.load %arg10[%c0_15, %c127] : memref<16x512xbf16, #tpu.memory_space<vmem>>, vector<16x256xbf16>
    %20 = vector.broadcast %3 : vector<1x256xbf16> to vector<16x256xbf16>
    %21 = arith.mulf %19, %20 : vector<16x256xbf16>
    %c48 = arith.constant 48 : index
    %c0_16 = arith.constant 0 : index
    %22 = vector.load %arg11[%c48, %c0_16] : memref<144x256xbf16, #tpu.memory_space<vmem>>, vector<16x256xbf16>
    tpu.vector_store %arg11[%c48, %c0_16], %21 {strides = array<i32>} : memref<144x256xbf16, #tpu.memory_space<vmem>>, vector<16x256xbf16>,
    %c0_17 = arith.constant 0 : index
    %c128_18 = arith.constant 128 : index
    %23 = vector.load %arg10[%c0_17, %c128_18] : memref<16x512xbf16, #tpu.memory_space<vmem>>, vector<16x256xbf16>
    %c64 = arith.constant 64 : index
    %c0_19 = arith.constant 0 : index
    %24 = vector.load %arg11[%c64, %c0_19] : memref<144x256xbf16, #tpu.memory_space<vmem>>, vector<16x256xbf16>
    tpu.vector_store %arg11[%c64, %c0_19], %23 {strides = array<i32>} : memref<144x256xbf16, #tpu.memory_space<vmem>>, vector<16x256xbf16>,
    %c0_20 = arith.constant 0 : index
    %c129 = arith.constant 129 : index
    %25 = vector.load %arg10[%c0_20, %c129] : memref<16x512xbf16, #tpu.memory_space<vmem>>, vector<16x256xbf16>
    %26 = vector.broadcast %5 : vector<1x256xbf16> to vector<16x256xbf16>
    %27 = arith.mulf %25, %26 : vector<16x256xbf16>
    %c80 = arith.constant 80 : index
    %c0_21 = arith.constant 0 : index
    %28 = vector.load %arg11[%c80, %c0_21] : memref<144x256xbf16, #tpu.memory_space<vmem>>, vector<16x256xbf16>
    tpu.vector_store %arg11[%c80, %c0_21], %27 {strides = array<i32>} : memref<144x256xbf16, #tpu.memory_space<vmem>>, vector<16x256xbf16>,
    %c0_22 = arith.constant 0 : index
    %c143 = arith.constant 143 : index
    %29 = vector.load %arg10[%c0_22, %c143] : memref<16x512xbf16, #tpu.memory_space<vmem>>, vector<16x256xbf16>
    %30 = vector.broadcast %3 : vector<1x256xbf16> to vector<16x256xbf16>
    %31 = arith.mulf %29, %30 : vector<16x256xbf16>
    %c96 = arith.constant 96 : index
    %c0_23 = arith.constant 0 : index
    %32 = vector.load %arg11[%c96, %c0_23] : memref<144x256xbf16, #tpu.memory_space<vmem>>, vector<16x256xbf16>
    tpu.vector_store %arg11[%c96, %c0_23], %31 {strides = array<i32>} : memref<144x256xbf16, #tpu.memory_space<vmem>>, vector<16x256xbf16>,
    %c0_24 = arith.constant 0 : index
    %c144 = arith.constant 144 : index
    %33 = vector.load %arg10[%c0_24, %c144] : memref<16x512xbf16, #tpu.memory_space<vmem>>, vector<16x256xbf16>
    %c112_25 = arith.constant 112 : index
    %c0_26 = arith.constant 0 : index
    %34 = vector.load %arg11[%c112_25, %c0_26] : memref<144x256xbf16, #tpu.memory_space<vmem>>, vector<16x256xbf16>
    tpu.vector_store %arg11[%c112_25, %c0_26], %33 {strides = array<i32>} : memref<144x256xbf16, #tpu.memory_space<vmem>>, vector<16x256xbf16>,
    %c0_27 = arith.constant 0 : index
    %c145 = arith.constant 145 : index
    %35 = vector.load %arg10[%c0_27, %c145] : memref<16x512xbf16, #tpu.memory_space<vmem>>, vector<16x256xbf16>
    %36 = vector.broadcast %5 : vector<1x256xbf16> to vector<16x256xbf16>
    %37 = arith.mulf %35, %36 : vector<16x256xbf16>
    %c128_28 = arith.constant 128 : index
    %c0_29 = arith.constant 0 : index
    %38 = vector.load %arg11[%c128_28, %c0_29] : memref<144x256xbf16, #tpu.memory_space<vmem>>, vector<16x256xbf16>
    tpu.vector_store %arg11[%c128_28, %c0_29], %37 {strides = array<i32>} : memref<144x256xbf16, #tpu.memory_space<vmem>>, vector<16x256xbf16>,
    %c0_30 = arith.constant 0 : index
    %c0_31 = arith.constant 0 : index
    %39 = vector.load %arg2[%c0_30, %c0_31] : memref<8x144xbf16, #tpu.memory_space<vmem>>, vector<8x144xbf16>
    %c0_32 = arith.constant 0 : index
    %c0_33 = arith.constant 0 : index
    %40 = vector.load %arg11[%c0_32, %c0_33] : memref<144x256xbf16, #tpu.memory_space<vmem>>, vector<144x256xbf16>
    %cst_34 = arith.constant dense<0.000000e+00> : vector<8x256xf32>
    %41 = tpu.matmul %39, %40, %cst_34 {dimension_numbers = #tpu.dot_dimension_numbers<[1], [0], [0], [1], [0, 0, 1, 1], [], []>} : vector<8x144xbf16>, vector<144x256xbf16>, vector<8x256xf32> -> vector<8x256xf32>
    %c0_35 = arith.constant 0 : index
    %c0_36 = arith.constant 0 : index
    %42 = vector.load %arg3[%c0_35, %c0_36] : memref<8x1xf32, #tpu.memory_space<vmem>>, vector<8x1xf32>
    %43 = vector.broadcast %42 : vector<8x1xf32> to vector<8x256xf32>
    %44 = arith.addf %41, %43 : vector<8x256xf32>
    %cst_37 = arith.constant 0.000000e+00 : f32
    %45 = vector.broadcast %cst_37 : f32 to vector<8x256xf32>
    %46 = arith.maximumf %44, %45 : vector<8x256xf32>
    %47 = arith.truncf %46 : vector<8x256xf32> to vector<8x256xbf16>
    %c0_38 = arith.constant 0 : index
    %c128_39 = arith.constant 128 : index
    %48 = vector.load %arg10[%c0_38, %c128_39] : memref<16x512xbf16, #tpu.memory_space<vmem>>, vector<8x256xbf16>
    tpu.vector_store %arg10[%c0_38, %c128_39], %47 {strides = array<i32>} : memref<16x512xbf16, #tpu.memory_space<vmem>>, vector<8x256xbf16>,
    %c0_40 = arith.constant 0 : index
    %c111_41 = arith.constant 111 : index
    %49 = vector.load %arg10[%c0_40, %c111_41] : memref<16x512xbf16, #tpu.memory_space<vmem>>, vector<16x256xbf16>
    %50 = vector.broadcast %3 : vector<1x256xbf16> to vector<16x256xbf16>
    %51 = arith.mulf %49, %50 : vector<16x256xbf16>
    %c0_42 = arith.constant 0 : index
    %c0_43 = arith.constant 0 : index
    %52 = vector.load %arg11[%c0_42, %c0_43] : memref<144x256xbf16, #tpu.memory_space<vmem>>, vector<16x256xbf16>
    tpu.vector_store %arg11[%c0_42, %c0_43], %51 {strides = array<i32>} : memref<144x256xbf16, #tpu.memory_space<vmem>>, vector<16x256xbf16>,
    %c0_44 = arith.constant 0 : index
    %c112_45 = arith.constant 112 : index
    %53 = vector.load %arg10[%c0_44, %c112_45] : memref<16x512xbf16, #tpu.memory_space<vmem>>, vector<16x256xbf16>
    %c16_46 = arith.constant 16 : index
    %c0_47 = arith.constant 0 : index
    %54 = vector.load %arg11[%c16_46, %c0_47] : memref<144x256xbf16, #tpu.memory_space<vmem>>, vector<16x256xbf16>
    tpu.vector_store %arg11[%c16_46, %c0_47], %53 {strides = array<i32>} : memref<144x256xbf16, #tpu.memory_space<vmem>>, vector<16x256xbf16>,
    %c0_48 = arith.constant 0 : index
    %c113_49 = arith.constant 113 : index
    %55 = vector.load %arg10[%c0_48, %c113_49] : memref<16x512xbf16, #tpu.memory_space<vmem>>, vector<16x256xbf16>
    %56 = vector.broadcast %5 : vector<1x256xbf16> to vector<16x256xbf16>
    %57 = arith.mulf %55, %56 : vector<16x256xbf16>
    %c32_50 = arith.constant 32 : index
    %c0_51 = arith.constant 0 : index
    %58 = vector.load %arg11[%c32_50, %c0_51] : memref<144x256xbf16, #tpu.memory_space<vmem>>, vector<16x256xbf16>
    tpu.vector_store %arg11[%c32_50, %c0_51], %57 {strides = array<i32>} : memref<144x256xbf16, #tpu.memory_space<vmem>>, vector<16x256xbf16>,
    %c0_52 = arith.constant 0 : index
    %c127_53 = arith.constant 127 : index
    %59 = vector.load %arg10[%c0_52, %c127_53] : memref<16x512xbf16, #tpu.memory_space<vmem>>, vector<16x256xbf16>
    %60 = vector.broadcast %3 : vector<1x256xbf16> to vector<16x256xbf16>
    %61 = arith.mulf %59, %60 : vector<16x256xbf16>
    %c48_54 = arith.constant 48 : index
    %c0_55 = arith.constant 0 : index
    %62 = vector.load %arg11[%c48_54, %c0_55] : memref<144x256xbf16, #tpu.memory_space<vmem>>, vector<16x256xbf16>
    tpu.vector_store %arg11[%c48_54, %c0_55], %61 {strides = array<i32>} : memref<144x256xbf16, #tpu.memory_space<vmem>>, vector<16x256xbf16>,
    %c0_56 = arith.constant 0 : index
    %c128_57 = arith.constant 128 : index
    %63 = vector.load %arg10[%c0_56, %c128_57] : memref<16x512xbf16, #tpu.memory_space<vmem>>, vector<16x256xbf16>
    %c64_58 = arith.constant 64 : index
    %c0_59 = arith.constant 0 : index
    %64 = vector.load %arg11[%c64_58, %c0_59] : memref<144x256xbf16, #tpu.memory_space<vmem>>, vector<16x256xbf16>
    tpu.vector_store %arg11[%c64_58, %c0_59], %63 {strides = array<i32>} : memref<144x256xbf16, #tpu.memory_space<vmem>>, vector<16x256xbf16>,
    %c0_60 = arith.constant 0 : index
    %c129_61 = arith.constant 129 : index
    %65 = vector.load %arg10[%c0_60, %c129_61] : memref<16x512xbf16, #tpu.memory_space<vmem>>, vector<16x256xbf16>
    %66 = vector.broadcast %5 : vector<1x256xbf16> to vector<16x256xbf16>
    %67 = arith.mulf %65, %66 : vector<16x256xbf16>
    %c80_62 = arith.constant 80 : index
    %c0_63 = arith.constant 0 : index
    %68 = vector.load %arg11[%c80_62, %c0_63] : memref<144x256xbf16, #tpu.memory_space<vmem>>, vector<16x256xbf16>
    tpu.vector_store %arg11[%c80_62, %c0_63], %67 {strides = array<i32>} : memref<144x256xbf16, #tpu.memory_space<vmem>>, vector<16x256xbf16>,
    %c0_64 = arith.constant 0 : index
    %c143_65 = arith.constant 143 : index
    %69 = vector.load %arg10[%c0_64, %c143_65] : memref<16x512xbf16, #tpu.memory_space<vmem>>, vector<16x256xbf16>
    %70 = vector.broadcast %3 : vector<1x256xbf16> to vector<16x256xbf16>
    %71 = arith.mulf %69, %70 : vector<16x256xbf16>
    %c96_66 = arith.constant 96 : index
    %c0_67 = arith.constant 0 : index
    %72 = vector.load %arg11[%c96_66, %c0_67] : memref<144x256xbf16, #tpu.memory_space<vmem>>, vector<16x256xbf16>
    tpu.vector_store %arg11[%c96_66, %c0_67], %71 {strides = array<i32>} : memref<144x256xbf16, #tpu.memory_space<vmem>>, vector<16x256xbf16>,
    %c0_68 = arith.constant 0 : index
    %c144_69 = arith.constant 144 : index
    %73 = vector.load %arg10[%c0_68, %c144_69] : memref<16x512xbf16, #tpu.memory_space<vmem>>, vector<16x256xbf16>
    %c112_70 = arith.constant 112 : index
    %c0_71 = arith.constant 0 : index
    %74 = vector.load %arg11[%c112_70, %c0_71] : memref<144x256xbf16, #tpu.memory_space<vmem>>, vector<16x256xbf16>
    tpu.vector_store %arg11[%c112_70, %c0_71], %73 {strides = array<i32>} : memref<144x256xbf16, #tpu.memory_space<vmem>>, vector<16x256xbf16>,
    %c0_72 = arith.constant 0 : index
    %c145_73 = arith.constant 145 : index
    %75 = vector.load %arg10[%c0_72, %c145_73] : memref<16x512xbf16, #tpu.memory_space<vmem>>, vector<16x256xbf16>
    %76 = vector.broadcast %5 : vector<1x256xbf16> to vector<16x256xbf16>
    %77 = arith.mulf %75, %76 : vector<16x256xbf16>
    %c128_74 = arith.constant 128 : index
    %c0_75 = arith.constant 0 : index
    %78 = vector.load %arg11[%c128_74, %c0_75] : memref<144x256xbf16, #tpu.memory_space<vmem>>, vector<16x256xbf16>
    tpu.vector_store %arg11[%c128_74, %c0_75], %77 {strides = array<i32>} : memref<144x256xbf16, #tpu.memory_space<vmem>>, vector<16x256xbf16>,
    %c0_76 = arith.constant 0 : index
    %c0_77 = arith.constant 0 : index
    %79 = vector.load %arg4[%c0_76, %c0_77] : memref<8x144xbf16, #tpu.memory_space<vmem>>, vector<8x144xbf16>
    %c0_78 = arith.constant 0 : index
    %c0_79 = arith.constant 0 : index
    %80 = vector.load %arg11[%c0_78, %c0_79] : memref<144x256xbf16, #tpu.memory_space<vmem>>, vector<144x256xbf16>
    %cst_80 = arith.constant dense<0.000000e+00> : vector<8x256xf32>
    %81 = tpu.matmul %79, %80, %cst_80 {dimension_numbers = #tpu.dot_dimension_numbers<[1], [0], [0], [1], [0, 0, 1, 1], [], []>} : vector<8x144xbf16>, vector<144x256xbf16>, vector<8x256xf32> -> vector<8x256xf32>
    %c0_81 = arith.constant 0 : index
    %c0_82 = arith.constant 0 : index
    %82 = vector.load %arg5[%c0_81, %c0_82] : memref<8x1xf32, #tpu.memory_space<vmem>>, vector<8x1xf32>
    %83 = vector.broadcast %82 : vector<8x1xf32> to vector<8x256xf32>
    %84 = arith.addf %81, %83 : vector<8x256xf32>
    %c0_83 = arith.constant 0 : index
    %c0_84 = arith.constant 0 : index
    %85 = vector.load %arg7[%c0_83, %c0_84] : memref<8x4xbf16, #tpu.memory_space<vmem>>, vector<8x4xbf16>
    %c0_85 = arith.constant 0 : index
    %c0_86 = arith.constant 0 : index
    %c0_87 = arith.constant 0 : index
    %86 = vector.load %arg1[%c0_85, %c0_86, %c0_87] : memref<1x4x256xbf16, #tpu.memory_space<vmem>>, vector<1x4x256xbf16>
    %87 = vector.shape_cast %86 : vector<1x4x256xbf16> to vector<4x256xbf16>
    %cst_88 = arith.constant dense<0.000000e+00> : vector<8x256xf32>
    %88 = tpu.matmul %85, %87, %cst_88 {dimension_numbers = #tpu.dot_dimension_numbers<[1], [0], [0], [1], [0, 0, 1, 1], [], []>} : vector<8x4xbf16>, vector<4x256xbf16>, vector<8x256xf32> -> vector<8x256xf32>
    %c0_89 = arith.constant 0 : index
    %c0_90 = arith.constant 0 : index
    %89 = vector.load %arg8[%c0_89, %c0_90] : memref<8x1xf32, #tpu.memory_space<vmem>>, vector<8x1xf32>
    %90 = vector.broadcast %89 : vector<8x1xf32> to vector<8x256xf32>
    %91 = arith.addf %88, %90 : vector<8x256xf32>
    %92 = arith.addf %84, %91 : vector<8x256xf32>
    %cst_91 = arith.constant 0.000000e+00 : f32
    %93 = vector.broadcast %cst_91 : f32 to vector<8x256xf32>
    %94 = arith.maximumf %92, %93 : vector<8x256xf32>
    %c0_92 = arith.constant 0 : index
    %c0_93 = arith.constant 0 : index
    %c0_94 = arith.constant 0 : index
    %95 = vector.load %arg9[%c0_92, %c0_93, %c0_94] : memref<1x8x256xf32, #tpu.memory_space<vmem>>, vector<1x8x256xf32>
    %96 = vector.shape_cast %95 : vector<1x8x256xf32> to vector<8x256xf32>
    %97 = vector.shape_cast %94 : vector<8x256xf32> to vector<1x8x256xf32>
    tpu.vector_store %arg9[%c0_92, %c0_93, %c0_94], %97 {strides = array<i32>} : memref<1x8x256xf32, #tpu.memory_space<vmem>>, vector<1x8x256xf32>,
    return
  }
  func.func @transform_0(%arg0: i32) -> (i32, i32, i32) {
    %c0_i32 = arith.constant 0 : i32
    %c0_i32_0 = arith.constant 0 : i32
    %c0_i32_1 = arith.constant 0 : i32
    return %arg0, %c0_i32, %c0_i32_0 : i32, i32, i32
  }
  func.func @transform_1(%arg0: i32) -> (i32, i32) {
    %c0_i32 = arith.constant 0 : i32
    %c0_i32_0 = arith.constant 0 : i32
    %c0_i32_1 = arith.constant 0 : i32
    return %c0_i32, %c0_i32_0 : i32, i32
  }
  func.func @transform_2(%arg0: i32) -> (i32, i32) {
    %c0_i32 = arith.constant 0 : i32
    %c0_i32_0 = arith.constant 0 : i32
    %c0_i32_1 = arith.constant 0 : i32
    return %c0_i32, %c0_i32_0 : i32, i32
  }
  func.func @transform_3(%arg0: i32) -> (i32, i32) {
    %c0_i32 = arith.constant 0 : i32
    %c0_i32_0 = arith.constant 0 : i32
    %c0_i32_1 = arith.constant 0 : i32
    return %c0_i32, %c0_i32_0 : i32, i32
  }
  func.func @transform_4(%arg0: i32) -> (i32, i32) {
    %c0_i32 = arith.constant 0 : i32
    %c0_i32_0 = arith.constant 0 : i32
    %c0_i32_1 = arith.constant 0 : i32
    return %c0_i32, %c0_i32_0 : i32, i32
  }
  func.func @transform_5(%arg0: i32) -> (i32, i32) {
    %c0_i32 = arith.constant 0 : i32
    %c0_i32_0 = arith.constant 0 : i32
    %c0_i32_1 = arith.constant 0 : i32
    return %c0_i32, %c0_i32_0 : i32, i32
  }
  func.func @transform_6(%arg0: i32) -> (i32, i32) {
    %c0_i32 = arith.constant 0 : i32
    %c0_i32_0 = arith.constant 0 : i32
    %c0_i32_1 = arith.constant 0 : i32
    return %c0_i32, %c0_i32_0 : i32, i32
  }
  func.func @transform_7(%arg0: i32) -> (i32, i32) {
    %c0_i32 = arith.constant 0 : i32
    %c0_i32_0 = arith.constant 0 : i32
    %c0_i32_1 = arith.constant 0 : i32
    return %c0_i32, %c0_i32_0 : i32, i32
  }
  func.func @transform_8(%arg0: i32) -> (i32, i32, i32) {
    %c0_i32 = arith.constant 0 : i32
    %c0_i32_0 = arith.constant 0 : i32
    %c0_i32_1 = arith.constant 0 : i32
    return %arg0, %c0_i32, %c0_i32_0 : i32, i32, i32
  }
}

</mosaic_0001>

<llo_original>
// kernel: tpu_custom_call.1
$region0: #{tpu_custom_call.1}
  #allocation0 [shape = 'u32[]', space=smem, size = 0x4, offset = 0x4, fixed_abs, tag = 'smem constant byte address 0x4 - core index']
  #allocation1 [shape = 'u32[72,128]{1,0:T(1,128)}', space=vmem, size = 0x9000, scoped, tag = 'internal scratch']
  #allocation2 [shape = 'bf16[16,512]{1,0:T(8,128)(2,1)}', space=vmem, size = 0x4000, scoped, tag = 'scratch operand']
  #allocation3 [shape = 'bf16[144,256]{1,0:T(8,128)(2,1)}', space=vmem, size = 0x12000, scoped, tag = 'scratch operand']
  %s0 = inlined_call_operand.vmem [shape: bf16[2,4,256], index: 0, kind: input, shape index: {}]
  %s1 = inlined_call_operand.vmem [shape: bf16[8,144], index: 1, kind: input, shape index: {}]
  %s2 = inlined_call_operand.vmem [shape: f32[8,1], index: 2, kind: input, shape index: {}]
  %s3 = inlined_call_operand.vmem [shape: bf16[8,144], index: 3, kind: input, shape index: {}]
  %s4 = inlined_call_operand.vmem [shape: f32[8,1], index: 4, kind: input, shape index: {}]
  %s5 = inlined_call_operand.vmem [shape: f32[2,256], index: 5, kind: input, shape index: {}]
  %s6 = inlined_call_operand.vmem [shape: bf16[8,4], index: 6, kind: input, shape index: {}]
  %s7 = inlined_call_operand.vmem [shape: f32[8,1], index: 7, kind: input, shape index: {}]
  %s8 = inlined_call_operand.hbm [shape: f32[2,8,256], index: 8, kind: output, shape index: {}]
  %s9 = sld [smem:[#allocation0]]
  $region65: #{tpu_custom_call.1} parent=0
    _
  %s11 = ssub.s32 1, %s9
  %s12 = scalar_select 0, %s11, %s9
  $region1: #{tpu_custom_call.1} parent=0
    #allocation4 [shape = 'u8[16384]{0}', space=vmem, size = 0x4000, scoped, tag = 'output window, operand 0']
    #allocation5 [shape = 's32[2]{0}', space=sflag, size = 0x8, scoped, tag = 'scoped memory for tpu_custom_call.1']
    %13 = vsyncpa [#allocation5], 0
    %s14 = scalar_lea.sflag [#allocation5], 1
    %15 = vsyncpa %s14, 0
    loop: start=0, step=1, limit=4
    $region2: #{tpu_custom_call.1} parent=1 // loop_pre_header
      _
    $region3: #{tpu_custom_call.1} parent=1 // loop_header
      %s17 = sphi 0, %s21
      %p18 = scmp.ge.s32.totalorder %s17, 4
      %s27 = sphi 0, %s29
      %s30 = sphi 0, %s27
      %s31 = sphi 0, %s30
      %s47 = sphi 0, %s31
      %s51 = sphi 0, %s51
      %s53 = sphi 0, %s51
      %s54 = sphi 0, %s53
      %s68 = sphi 0, %s54
      %s72 = sphi 0, %s72
      %s74 = sphi 0, %s72
      %s75 = sphi 0, %s74
      %s89 = sphi 0, %s75
      %s93 = sphi 0, %s93
      %s95 = sphi 0, %s93
      %s96 = sphi 0, %s95
      %s110 = sphi 0, %s96
      %s114 = sphi 0, %s114
      %s116 = sphi 0, %s114
      %s117 = sphi 0, %s116
      %s131 = sphi 0, %s117
      %s135 = sphi 0, %s135
      %s137 = sphi 0, %s135
      %s138 = sphi 0, %s137
      %s152 = sphi 0, %s138
      %s156 = sphi 0, %s156
      %s158 = sphi 0, %s156
      %s159 = sphi 0, %s158
      %s173 = sphi 0, %s159
      %s177 = sphi 0, %s177
      %s179 = sphi 0, %s177
      %s180 = sphi 0, %s179
      %s194 = sphi 0, %s180
      %s200 = sphi 0, %s202
      %s203 = sphi 0, %s200
      %s204 = sphi 0, %s203
      %s220 = sphi 0, %s204
    $region4: #{tpu_custom_call.1} parent=1 // loop_header_branch
      %20 = sbr.rel (%p18) target = $region8
    $region5: #{tpu_custom_call.1} parent=1 // loop_body
      %s22 = ssub.s32 %s17, 1
      %s23 = ssub.s32 %s17, 2
      %s24 = sadd.s32 %s17, 1
      %s25 = ssub.s32 %s17, %s24
      %p26 = scmp.eq.s32.totalorder %s25, 0
      %s28 = sadd.s32 %s27, 1
      %s29 = scalar_select %p26, %s27, %s28
      %p32 = pneg %p26
      %p33 = scmp.eq.s32.totalorder %s17, 1
      %p34 = por %p32, %p33
      %p35 = scmp.ne.s32.totalorder %s27, %s30
      %p36 = scmp.eq.s32.totalorder %s17, 0
      %p37 = por %p35, %p36
      %p38 = scmp.ne.s32.totalorder %s27, %s30
      %p39 = scmp.eq.s32.totalorder %s22, 1
      %p40 = por %p38, %p39
      %p41 = scmp.ne.s32.totalorder %s30, %s31
      %p42 = scmp.eq.s32.totalorder %s22, 0
      %p43 = por %p41, %p42
      %p44 = scmp.ne.s32.totalorder %s30, %s31
      %p45 = scmp.eq.s32.totalorder %s23, 1
      %p46 = por %p44, %p45
      %p48 = scmp.ne.s32.totalorder %s31, %s47
      %p49 = scmp.eq.s32.totalorder %s23, 0
      %p50 = por %p48, %p49
      %s52 = sadd.s32 %s51, 1
      %p55 = scmp.eq.s32.totalorder %s17, 1
      %p56 = scmp.ne.s32.totalorder %s51, %s53
      %p57 = scmp.eq.s32.totalorder %s17, 0
      %p58 = por %p56, %p57
      %p59 = scmp.ne.s32.totalorder %s51, %s53
      %p60 = scmp.eq.s32.totalorder %s22, 1
      %p61 = por %p59, %p60
      %p62 = scmp.ne.s32.totalorder %s53, %s54
      %p63 = scmp.eq.s32.totalorder %s22, 0
      %p64 = por %p62, %p63
      %p65 = scmp.ne.s32.totalorder %s53, %s54
      %p66 = scmp.eq.s32.totalorder %s23, 1
      %p67 = por %p65, %p66
      %p69 = scmp.ne.s32.totalorder %s54, %s68
      %p70 = scmp.eq.s32.totalorder %s23, 0
      %p71 = por %p69, %p70
      %s73 = sadd.s32 %s72, 1
      %p76 = scmp.eq.s32.totalorder %s17, 1
      %p77 = scmp.ne.s32.totalorder %s72, %s74
      %p78 = scmp.eq.s32.totalorder %s17, 0
      %p79 = por %p77, %p78
      %p80 = scmp.ne.s32.totalorder %s72, %s74
      %p81 = scmp.eq.s32.totalorder %s22, 1
      %p82 = por %p80, %p81
      %p83 = scmp.ne.s32.totalorder %s74, %s75
      %p84 = scmp.eq.s32.totalorder %s22, 0
      %p85 = por %p83, %p84
      %p86 = scmp.ne.s32.totalorder %s74, %s75
      %p87 = scmp.eq.s32.totalorder %s23, 1
      %p88 = por %p86, %p87
      %p90 = scmp.ne.s32.totalorder %s75, %s89
      %p91 = scmp.eq.s32.totalorder %s23, 0
      %p92 = por %p90, %p91
      %s94 = sadd.s32 %s93, 1
      %p97 = scmp.eq.s32.totalorder %s17, 1
      %p98 = scmp.ne.s32.totalorder %s93, %s95
      %p99 = scmp.eq.s32.totalorder %s17, 0
      %p100 = por %p98, %p99
      %p101 = scmp.ne.s32.totalorder %s93, %s95
      %p102 = scmp.eq.s32.totalorder %s22, 1
      %p103 = por %p101, %p102
      %p104 = scmp.ne.s32.totalorder %s95, %s96
      %p105 = scmp.eq.s32.totalorder %s22, 0
      %p106 = por %p104, %p105
      %p107 = scmp.ne.s32.totalorder %s95, %s96
      %p108 = scmp.eq.s32.totalorder %s23, 1
      %p109 = por %p107, %p108
      %p111 = scmp.ne.s32.totalorder %s96, %s110
      %p112 = scmp.eq.s32.totalorder %s23, 0
      %p113 = por %p111, %p112
      %s115 = sadd.s32 %s114, 1
      %p118 = scmp.eq.s32.totalorder %s17, 1
      %p119 = scmp.ne.s32.totalorder %s114, %s116
      %p120 = scmp.eq.s32.totalorder %s17, 0
      %p121 = por %p119, %p120
      %p122 = scmp.ne.s32.totalorder %s114, %s116
      %p123 = scmp.eq.s32.totalorder %s22, 1
      %p124 = por %p122, %p123
      %p125 = scmp.ne.s32.totalorder %s116, %s117
      %p126 = scmp.eq.s32.totalorder %s22, 0
      %p127 = por %p125, %p126
      %p128 = scmp.ne.s32.totalorder %s116, %s117
      %p129 = scmp.eq.s32.totalorder %s23, 1
      %p130 = por %p128, %p129
      %p132 = scmp.ne.s32.totalorder %s117, %s131
      %p133 = scmp.eq.s32.totalorder %s23, 0
      %p134 = por %p132, %p133
      %s136 = sadd.s32 %s135, 1
      %p139 = scmp.eq.s32.totalorder %s17, 1
      %p140 = scmp.ne.s32.totalorder %s135, %s137
      %p141 = scmp.eq.s32.totalorder %s17, 0
      %p142 = por %p140, %p141
      %p143 = scmp.ne.s32.totalorder %s135, %s137
      %p144 = scmp.eq.s32.totalorder %s22, 1
      %p145 = por %p143, %p144
      %p146 = scmp.ne.s32.totalorder %s137, %s138
      %p147 = scmp.eq.s32.totalorder %s22, 0
      %p148 = por %p146, %p147
      %p149 = scmp.ne.s32.totalorder %s137, %s138
      %p150 = scmp.eq.s32.totalorder %s23, 1
      %p151 = por %p149, %p150
      %p153 = scmp.ne.s32.totalorder %s138, %s152
      %p154 = scmp.eq.s32.totalorder %s23, 0
      %p155 = por %p153, %p154
      %s157 = sadd.s32 %s156, 1
      %p160 = scmp.eq.s32.totalorder %s17, 1
      %p161 = scmp.ne.s32.totalorder %s156, %s158
      %p162 = scmp.eq.s32.totalorder %s17, 0
      %p163 = por %p161, %p162
      %p164 = scmp.ne.s32.totalorder %s156, %s158
      %p165 = scmp.eq.s32.totalorder %s22, 1
      %p166 = por %p164, %p165
      %p167 = scmp.ne.s32.totalorder %s158, %s159
      %p168 = scmp.eq.s32.totalorder %s22, 0
      %p169 = por %p167, %p168
      %p170 = scmp.ne.s32.totalorder %s158, %s159
      %p171 = scmp.eq.s32.totalorder %s23, 1
      %p172 = por %p170, %p171
      %p174 = scmp.ne.s32.totalorder %s159, %s173
      %p175 = scmp.eq.s32.totalorder %s23, 0
      %p176 = por %p174, %p175
      %s178 = sadd.s32 %s177, 1
      %p181 = scmp.eq.s32.totalorder %s17, 1
      %p182 = scmp.ne.s32.totalorder %s177, %s179
      %p183 = scmp.eq.s32.totalorder %s17, 0
      %p184 = por %p182, %p183
      %p185 = scmp.ne.s32.totalorder %s177, %s179
      %p186 = scmp.eq.s32.totalorder %s22, 1
      %p187 = por %p185, %p186
      %p188 = scmp.ne.s32.totalorder %s179, %s180
      %p189 = scmp.eq.s32.totalorder %s22, 0
      %p190 = por %p188, %p189
      %p191 = scmp.ne.s32.totalorder %s179, %s180
      %p192 = scmp.eq.s32.totalorder %s23, 1
      %p193 = por %p191, %p192
      %p195 = scmp.ne.s32.totalorder %s180, %s194
      %p196 = scmp.eq.s32.totalorder %s23, 0
      %p197 = por %p195, %p196
      %s198 = ssub.s32 %s17, %s24
      %p199 = scmp.eq.s32.totalorder %s198, 0
      %s201 = sadd.s32 %s200, 1
      %s202 = scalar_select %p199, %s200, %s201
      %p205 = pneg %p199
      %p206 = scmp.eq.s32.totalorder %s17, 1
      %p207 = por %p205, %p206
      %p208 = scmp.ne.s32.totalorder %s200, %s203
      %p209 = scmp.eq.s32.totalorder %s17, 0
      %p210 = por %p208, %p209
      %p211 = scmp.ne.s32.totalorder %s200, %s203
      %p212 = scmp.eq.s32.totalorder %s22, 1
      %p213 = por %p211, %p212
      %p214 = scmp.ne.s32.totalorder %s203, %s204
      %p215 = scmp.eq.s32.totalorder %s22, 0
      %p216 = por %p214, %p215
      %p217 = scmp.ne.s32.totalorder %s203, %s204
      %p218 = scmp.eq.s32.totalorder %s23, 1
      %p219 = por %p217, %p218
      %p221 = scmp.ne.s32.totalorder %s204, %s220
      %p222 = scmp.eq.s32.totalorder %s23, 0
      %p223 = por %p221, %p222
      %p224 = scmp.le.s32.totalorder 1, %s17
      %p225 = scmp.lt.s32.totalorder %s17, 3
      %p226 = pnand %p224, %p225
      %p227 = pneg %p226
      // Predicated region
      $region9: #{tpu_custom_call.1} parent=5 // pred_check
        _
      $region10: #{tpu_custom_call.1} parent=5 // pred_check_branch
        %229 = sbr.rel (%p226) target = $region12
      $region11: #{tpu_custom_call.1} parent=5 // pred_region
        %s230 = ssub.s32 %s17, 1
        // Predicated region
        $region13: #{tpu_custom_call.1} parent=11 // pred_check
          %p231 = pneg %p64
        $region14: #{tpu_custom_call.1} parent=11 // pred_check_branch
          %233 = sbr.rel (%p231) target = $region16
        $region15: #{tpu_custom_call.1} parent=11 // pred_region
          _
        $region16: #{tpu_custom_call.1} parent=11 // pred_fallthru
          _
        // Predicated region
        $region17: #{tpu_custom_call.1} parent=11 // pred_check
          %p234 = pneg %p85
        $region18: #{tpu_custom_call.1} parent=11 // pred_check_branch
          %236 = sbr.rel (%p234) target = $region20
        $region19: #{tpu_custom_call.1} parent=11 // pred_region
          _
        $region20: #{tpu_custom_call.1} parent=11 // pred_fallthru
          _
        // Predicated region
        $region21: #{tpu_custom_call.1} parent=11 // pred_check
          %p237 = pneg %p106
        $region22: #{tpu_custom_call.1} parent=11 // pred_check_branch
          %239 = sbr.rel (%p237) target = $region24
        $region23: #{tpu_custom_call.1} parent=11 // pred_region
          _
        $region24: #{tpu_custom_call.1} parent=11 // pred_fallthru
          _
        // Predicated region
        $region25: #{tpu_custom_call.1} parent=11 // pred_check
          %p240 = pneg %p127
        $region26: #{tpu_custom_call.1} parent=11 // pred_check_branch
          %242 = sbr.rel (%p240) target = $region28
        $region27: #{tpu_custom_call.1} parent=11 // pred_region
          _
        $region28: #{tpu_custom_call.1} parent=11 // pred_fallthru
          _
        // Predicated region
        $region29: #{tpu_custom_call.1} parent=11 // pred_check
          %p243 = pneg %p148
        $region30: #{tpu_custom_call.1} parent=11 // pred_check_branch
          %245 = sbr.rel (%p243) target = $region32
        $region31: #{tpu_custom_call.1} parent=11 // pred_region
          _
        $region32: #{tpu_custom_call.1} parent=11 // pred_fallthru
          _
        // Predicated region
        $region33: #{tpu_custom_call.1} parent=11 // pred_check
          %p246 = pneg %p169
        $region34: #{tpu_custom_call.1} parent=11 // pred_check_branch
          %248 = sbr.rel (%p246) target = $region36
        $region35: #{tpu_custom_call.1} parent=11 // pred_region
          _
        $region36: #{tpu_custom_call.1} parent=11 // pred_fallthru
          _
        // Predicated region
        $region37: #{tpu_custom_call.1} parent=11 // pred_check
          %p249 = pneg %p190
        $region38: #{tpu_custom_call.1} parent=11 // pred_check_branch
          %251 = sbr.rel (%p249) target = $region40
        $region39: #{tpu_custom_call.1} parent=11 // pred_region
          _
        $region40: #{tpu_custom_call.1} parent=11 // pred_fallthru
          _
      $region12: #{tpu_custom_call.1} parent=5 // pred_fallthru
        _
      %p252 = scmp.lt.s32.totalorder %s17, 2
      // Predicated region
      $region41: #{tpu_custom_call.1} parent=5 // pred_check
        %p253 = pneg %p252
      $region42: #{tpu_custom_call.1} parent=5 // pred_check_branch
        %255 = sbr.rel (%p253) target = $region44
      $region43: #{tpu_custom_call.1} parent=5 // pred_region
        // Predicated region
        $region45: #{tpu_custom_call.1} parent=43 // pred_check
          %p256 = pneg %p37
        $region46: #{tpu_custom_call.1} parent=43 // pred_check_branch
          %258 = sbr.rel (%p256) target = $region48
        $region47: #{tpu_custom_call.1} parent=43 // pred_region
          %p259 = scmp.lt.s32.totalorder %s17, 1
          %s260 = scalar_select %p259, %s17, 1
          %s261 = smul.addr %s260, 2
          %s262 = smul.addr %s261, 2
          %s263 = scalar_lea.vmem %s0, %s262
        $region48: #{tpu_custom_call.1} parent=43 // pred_fallthru
          _
      $region44: #{tpu_custom_call.1} parent=5 // pred_fallthru
        _
      %p264 = scmp.le.s32.totalorder 1, %s17
      %p265 = scmp.lt.s32.totalorder %s17, 3
      %p266 = pnand %p264, %p265
      %p267 = pneg %p266
      // Predicated region
      $region49: #{tpu_custom_call.1} parent=5 // pred_check
        _
      $region50: #{tpu_custom_call.1} parent=5 // pred_check_branch
        %269 = sbr.rel (%p266) target = $region52
      $region51: #{tpu_custom_call.1} parent=5 // pred_region
        %s270 = ssub.s32 %s17, 1
        %p271 = scmp.lt.s32.totalorder %s22, 1
        %s272 = scalar_select %p271, %s22, 1
        %s273 = smul.addr %s272, 2
        %s274 = smul.addr %s273, 2
        %s275 = scalar_lea.vmem %s0, %s274
        %p276 = pneg %p43
        %p277 = pneg %p40
        %p278 = pneg %p64
        %p279 = pneg %p61
        %p280 = pneg %p85
        %p281 = pneg %p82
        %p282 = pneg %p106
        %p283 = pneg %p103
        %p284 = pneg %p127
        %p285 = pneg %p124
        %p286 = pneg %p148
        %p287 = pneg %p145
        %p288 = pneg %p169
        %p289 = pneg %p166
        %p290 = pneg %p190
        %p291 = pneg %p187
        %p292 = pneg %p216
        %p293 = pneg %p213
        %s294 = sand.u32 %s203, 1
        %s295 = scalar_lea.sflag [#allocation5], %s294
        %s296 = sand.u32 %s203, 1
        %s297 = smul.addr %s296, 16
        %s298 = scalar_lea.vmem [#allocation4], %s297
        %p299 = scmp.lt.s32.totalorder %s22, 1
        %s300 = scalar_select %p299, %s22, 1
        %s301 = smul.addr %s300, 2
        %s302 = smul.addr %s301, 2
        %s303 = scalar_lea.vmem %s0, %s302
        %305 = vst [vmem:[#allocation2] sm:$0xff] 0
        %306 = vst [vmem:[#allocation2 + $0x8] sm:$0xff] 0
        %307 = vst [vmem:[#allocation2 + $0x10] sm:$0xff] 0
        %308 = vst [vmem:[#allocation2 + $0x18] sm:$0xff] 0
        %v309 = vld [vmem:[%s5] ss:$2 sm:$0x3]
        %v311 = vperm.slane %v309, 0
        %v312 = vperm.slane %v309, 1
        %v315 = vpack.c.bf16 %v312, %v311
        %s316 = scalar_lea.vmem %s5, 1
        %v317 = vld [vmem:[%s316] ss:$2 sm:$0x3]
        %v319 = vperm.slane %v317, 0
        %v320 = vperm.slane %v317, 1
        %v323 = vpack.c.bf16 %v320, %v319
        %v324 = vld [vmem:[%s303] sm:$0xf]
        %326 = vst [vmem:[#allocation1] ss:$2 sm:$0xff] %v324
        %v327 = vld.sshfl [vmem:[#allocation1] sm:$0xff pattern:$0x75643120]
        %329 = vst [vmem:[#allocation2 + $0x4] sm:$0x33] %v327
        %v330 = vld [vmem:[#allocation2] sm:$0xff]
        %v331 = vld [vmem:[#allocation2 + $0x8] sm:$0xf]
        %v332 = vld [vmem:[#allocation2 + $0x10] sm:$0xff]
        %v333 = vld [vmem:[#allocation2 + $0x18] sm:$0xf]
        %v335 = vunpack.c.l.b16 %v315
        %v336 = vunpack.c.h.b16 %v315
        %v337 = vpack.c.b16 %v335, %v335
        %v338 = vpack.c.b16 %v336, %v336
        %v340 = vpack.i.b16 %v337, %v337
        %v342 = vperm.slane %v340, 0
        %v344 = vpack.i.b16 %v338, %v338
        %v346 = vperm.slane %v344, 0
        %v347 = vunpack.c.l.bf16 %v330
        %v348 = vunpack.c.h.bf16 %v330
        %v349 = vunpack.c.l.bf16 %v331
        %v350 = vunpack.c.l.bf16 %v332
        %v351 = vunpack.c.h.bf16 %v332
        %v352 = vunpack.c.l.bf16 %v333
        %v353 = vunpack.c.l.bf16 %v342
        %v354 = vunpack.c.l.bf16 %v346
        %357 = vrot.lane.b32.xlu0 %v353, 111
        %v358 = vpop.permute.xlu0 %357
        %359 = vrot.lane.b32.xlu0 %v354, 111
        %v360 = vpop.permute.xlu0 %359
        %vm361 = vcmask 908288
        %v362 = vsel %vm361, %v358, %v360
        %v366 = vmul.f32 %v347, %v358
        %v367 = vmul.f32 %v348, %v362
        %v368 = vmul.f32 %v349, %v360
        %v369 = vmul.f32 %v350, %v358
        %v370 = vmul.f32 %v351, %v362
        %v371 = vmul.f32 %v352, %v360
        %v372 = vpack.c.bf16 %v367, %v366
        %v373 = vpack.c.bf16 %v368, %v368
        %v374 = vpack.c.bf16 %v370, %v369
        %v375 = vpack.c.bf16 %v371, %v371
        %380 = vrot.lane.b32.xlu0 %v372, 17
        %v381 = vpop.permute.xlu0 %380
        %382 = vrot.lane.b32.xlu0 %v373, 17
        %v383 = vpop.permute.xlu0 %382
        %384 = vrot.lane.b32.xlu0 %v374, 17
        %v385 = vpop.permute.xlu0 %384
        %386 = vrot.lane.b32.xlu0 %v375, 17
        %v387 = vpop.permute.xlu0 %386
        %v388 = vrot.slane %v381, 4
        %v389 = vrot.slane %v383, 4
        %v390 = vrot.slane %v385, 4
        %v391 = vrot.slane %v387, 4
        %vm392 = vcmask 1043456
        %v393 = vsel %vm392, %v388, %v389
        %vm394 = vcmask 138240
        %v395 = vsel %vm394, %v381, %v393
        %v396 = vsel %vm392, %v390, %v391
        %v397 = vsel %vm394, %v385, %v396
        %400 = vst [vmem:[#allocation3] sm:$0xff] %v395
        %401 = vst [vmem:[#allocation3 + $0x8] sm:$0xff] %v397
        %v402 = vld [vmem:[#allocation2] sm:$0xff]
        %v403 = vld [vmem:[#allocation2 + $0x8] sm:$0xf]
        %v404 = vld [vmem:[#allocation2 + $0x10] sm:$0xff]
        %v405 = vld [vmem:[#allocation2 + $0x18] sm:$0xf]
        %410 = vrot.lane.b32.xlu0 %v402, 16
        %v411 = vpop.permute.xlu0 %410
        %412 = vrot.lane.b32.xlu0 %v403, 16
        %v413 = vpop.permute.xlu0 %412
        %414 = vrot.lane.b32.xlu0 %v404, 16
        %v415 = vpop.permute.xlu0 %414
        %416 = vrot.lane.b32.xlu0 %v405, 16
        %v417 = vpop.permute.xlu0 %416
        %v418 = vrot.slane %v411, 4
        %v419 = vrot.slane %v413, 4
        %v420 = vrot.slane %v415, 4
        %v421 = vrot.slane %v417, 4
        %v422 = vsel %vm392, %v418, %v419
        %vm423 = vcmask 130048
        %v424 = vsel %vm423, %v411, %v422
        %v425 = vsel %vm392, %v420, %v421
        %v426 = vsel %vm423, %v415, %v425
        %429 = vst [vmem:[#allocation3 + $0x10] sm:$0xff] %v424
        %430 = vst [vmem:[#allocation3 + $0x18] sm:$0xff] %v426
        %v431 = vld [vmem:[#allocation2] sm:$0xff]
        %v432 = vld [vmem:[#allocation2 + $0x8] sm:$0xf]
        %v433 = vld [vmem:[#allocation2 + $0x10] sm:$0xff]
        %v434 = vld [vmem:[#allocation2 + $0x18] sm:$0xf]
        %v436 = vunpack.c.l.b16 %v323
        %v437 = vunpack.c.h.b16 %v323
        %v438 = vpack.c.b16 %v436, %v436
        %v439 = vpack.c.b16 %v437, %v437
        %v441 = vpack.i.b16 %v438, %v438
        %v443 = vperm.slane %v441, 0
        %v445 = vpack.i.b16 %v439, %v439
        %v447 = vperm.slane %v445, 0
        %v448 = vunpack.c.l.bf16 %v431
        %v449 = vunpack.c.h.bf16 %v431
        %v450 = vunpack.c.l.bf16 %v432
        %v451 = vunpack.c.l.bf16 %v433
        %v452 = vunpack.c.h.bf16 %v433
        %v453 = vunpack.c.l.bf16 %v434
        %v454 = vunpack.c.l.bf16 %v443
        %v455 = vunpack.c.l.bf16 %v447
        %458 = vrot.lane.b32.xlu0 %v454, 113
        %v459 = vpop.permute.xlu0 %458
        %460 = vrot.lane.b32.xlu0 %v455, 113
        %v461 = vpop.permute.xlu0 %460
        %vm462 = vcmask 924672
        %v463 = vsel %vm462, %v459, %v461
        %v467 = vmul.f32 %v448, %v459
        %v468 = vmul.f32 %v449, %v463
        %v469 = vmul.f32 %v450, %v461
        %v470 = vmul.f32 %v451, %v459
        %v471 = vmul.f32 %v452, %v463
        %v472 = vmul.f32 %v453, %v461
        %v473 = vpack.c.bf16 %v468, %v467
        %v474 = vpack.c.bf16 %v469, %v469
        %v475 = vpack.c.bf16 %v471, %v470
        %v476 = vpack.c.bf16 %v472, %v472
        %481 = vrot.lane.b32.xlu0 %v473, 15
        %v482 = vpop.permute.xlu0 %481
        %483 = vrot.lane.b32.xlu0 %v474, 15
        %v484 = vpop.permute.xlu0 %483
        %485 = vrot.lane.b32.xlu0 %v475, 15
        %v486 = vpop.permute.xlu0 %485
        %487 = vrot.lane.b32.xlu0 %v476, 15
        %v488 = vpop.permute.xlu0 %487
        %v489 = vrot.slane %v482, 4
        %v490 = vrot.slane %v484, 4
        %v491 = vrot.slane %v486, 4
        %v492 = vrot.slane %v488, 4
        %v493 = vsel %vm392, %v489, %v490
        %vm494 = vcmask 121856
        %v495 = vsel %vm494, %v482, %v493
        %v496 = vsel %vm392, %v491, %v492
        %v497 = vsel %vm494, %v486, %v496
        %500 = vst [vmem:[#allocation3 + $0x20] sm:$0xff] %v495
        %501 = vst [vmem:[#allocation3 + $0x28] sm:$0xff] %v497
        %v502 = vld [vmem:[#allocation2] sm:$0xff]
        %v503 = vld [vmem:[#allocation2 + $0x8] sm:$0xf]
        %v504 = vld [vmem:[#allocation2 + $0x10] sm:$0xff]
        %v505 = vld [vmem:[#allocation2 + $0x18] sm:$0xf]
        %v506 = vunpack.c.l.bf16 %v502
        %v507 = vunpack.c.h.bf16 %v502
        %v508 = vunpack.c.l.bf16 %v503
        %v509 = vunpack.c.l.bf16 %v504
        %v510 = vunpack.c.h.bf16 %v504
        %v511 = vunpack.c.l.bf16 %v505
        %512 = vrot.lane.b32.xlu0 %v353, 127
        %v513 = vpop.permute.xlu0 %512
        %514 = vrot.lane.b32.xlu0 %v354, 127
        %v515 = vpop.permute.xlu0 %514
        %vm516 = vcmask 1039360
        %v517 = vsel %vm516, %v513, %v515
        %v521 = vmul.f32 %v506, %v513
        %v522 = vmul.f32 %v507, %v517
        %v523 = vmul.f32 %v508, %v515
        %v524 = vmul.f32 %v509, %v513
        %v525 = vmul.f32 %v510, %v517
        %v526 = vmul.f32 %v511, %v515
        %v527 = vpack.c.bf16 %v522, %v521
        %v528 = vpack.c.bf16 %v523, %v523
        %v529 = vpack.c.bf16 %v525, %v524
        %v530 = vpack.c.bf16 %v526, %v526
        %535 = vrot.lane.b32.xlu0 %v527, 1
        %v536 = vpop.permute.xlu0 %535
        %537 = vrot.lane.b32.xlu0 %v528, 1
        %v538 = vpop.permute.xlu0 %537
        %539 = vrot.lane.b32.xlu0 %v529, 1
        %v540 = vpop.permute.xlu0 %539
        %541 = vrot.lane.b32.xlu0 %v530, 1
        %v542 = vpop.permute.xlu0 %541
        %v543 = vrot.slane %v536, 4
        %v544 = vrot.slane %v538, 4
        %v545 = vrot.slane %v540, 4
        %v546 = vrot.slane %v542, 4
        %v547 = vsel %vm392, %v543, %v544
        %vm548 = vcmask 7168
        %v549 = vsel %vm548, %v536, %v547
        %v550 = vsel %vm392, %v545, %v546
        %v551 = vsel %vm548, %v540, %v550
        %554 = vst [vmem:[#allocation3 + $0x30] sm:$0xff] %v549
        %555 = vst [vmem:[#allocation3 + $0x38] sm:$0xff] %v551
        %v556 = vld [vmem:[#allocation2 + $0x4] sm:$0xff]
        %v557 = vld [vmem:[#allocation2 + $0x14] sm:$0xff]
        %558 = vst [vmem:[#allocation3 + $0x40] sm:$0xff] %v556
        %559 = vst [vmem:[#allocation3 + $0x48] sm:$0xff] %v557
        %v560 = vld [vmem:[#allocation2 + $0x4] sm:$0xff]
        %v561 = vld [vmem:[#allocation2 + $0xc] sm:$0xf]
        %v562 = vld [vmem:[#allocation2 + $0x14] sm:$0xff]
        %v563 = vld [vmem:[#allocation2 + $0x1c] sm:$0xf]
        %v564 = vunpack.c.l.bf16 %v560
        %v565 = vunpack.c.h.bf16 %v560
        %v566 = vunpack.c.l.bf16 %v561
        %v567 = vunpack.c.l.bf16 %v562
        %v568 = vunpack.c.h.bf16 %v562
        %v569 = vunpack.c.l.bf16 %v563
        %570 = vrot.lane.b32.xlu0 %v454, 1
        %v571 = vpop.permute.xlu0 %570
        %572 = vrot.lane.b32.xlu0 %v455, 1
        %v573 = vpop.permute.xlu0 %572
        %vm574 = vcmask 7168
        %v575 = vsel %vm574, %v571, %v573
        %v579 = vmul.f32 %v564, %v571
        %v580 = vmul.f32 %v565, %v575
        %v581 = vmul.f32 %v566, %v573
        %v582 = vmul.f32 %v567, %v571
        %v583 = vmul.f32 %v568, %v575
        %v584 = vmul.f32 %v569, %v573
        %v585 = vpack.c.bf16 %v580, %v579
        %v586 = vpack.c.bf16 %v581, %v581
        %v587 = vpack.c.bf16 %v583, %v582
        %v588 = vpack.c.bf16 %v584, %v584
        %593 = vrot.lane.b32.xlu0 %v585, 127
        %v594 = vpop.permute.xlu0 %593
        %595 = vrot.lane.b32.xlu0 %v586, 127
        %v596 = vpop.permute.xlu0 %595
        %597 = vrot.lane.b32.xlu0 %v587, 127
        %v598 = vpop.permute.xlu0 %597
        %599 = vrot.lane.b32.xlu0 %v588, 127
        %v600 = vpop.permute.xlu0 %599
        %v601 = vrot.slane %v594, 4
        %v602 = vrot.slane %v596, 4
        %v603 = vrot.slane %v598, 4
        %v604 = vrot.slane %v600, 4
        %v605 = vsel %vm392, %v601, %v602
        %vm606 = vcmask 1039360
        %v607 = vsel %vm606, %v594, %v605
        %v608 = vsel %vm392, %v603, %v604
        %v609 = vsel %vm606, %v598, %v608
        %612 = vst [vmem:[#allocation3 + $0x50] sm:$0xff] %v607
        %613 = vst [vmem:[#allocation3 + $0x58] sm:$0xff] %v609
        %v614 = vld [vmem:[#allocation2 + $0x4] sm:$0xff]
        %v615 = vld [vmem:[#allocation2 + $0xc] sm:$0xf]
        %v616 = vld [vmem:[#allocation2 + $0x14] sm:$0xff]
        %v617 = vld [vmem:[#allocation2 + $0x1c] sm:$0xf]
        %v618 = vunpack.c.l.bf16 %v614
        %v619 = vunpack.c.h.bf16 %v614
        %v620 = vunpack.c.l.bf16 %v615
        %v621 = vunpack.c.l.bf16 %v616
        %v622 = vunpack.c.h.bf16 %v616
        %v623 = vunpack.c.l.bf16 %v617
        %624 = vrot.lane.b32.xlu0 %v353, 15
        %v625 = vpop.permute.xlu0 %624
        %626 = vrot.lane.b32.xlu0 %v354, 15
        %v627 = vpop.permute.xlu0 %626
        %vm628 = vcmask 121856
        %v629 = vsel %vm628, %v625, %v627
        %v633 = vmul.f32 %v618, %v625
        %v634 = vmul.f32 %v619, %v629
        %v635 = vmul.f32 %v620, %v627
        %v636 = vmul.f32 %v621, %v625
        %v637 = vmul.f32 %v622, %v629
        %v638 = vmul.f32 %v623, %v627
        %v639 = vpack.c.bf16 %v634, %v633
        %v640 = vpack.c.bf16 %v635, %v635
        %v641 = vpack.c.bf16 %v637, %v636
        %v642 = vpack.c.bf16 %v638, %v638
        %647 = vrot.lane.b32.xlu0 %v639, 113
        %v648 = vpop.permute.xlu0 %647
        %649 = vrot.lane.b32.xlu0 %v640, 113
        %v650 = vpop.permute.xlu0 %649
        %651 = vrot.lane.b32.xlu0 %v641, 113
        %v652 = vpop.permute.xlu0 %651
        %653 = vrot.lane.b32.xlu0 %v642, 113
        %v654 = vpop.permute.xlu0 %653
        %v655 = vrot.slane %v648, 4
        %v656 = vrot.slane %v650, 4
        %v657 = vrot.slane %v652, 4
        %v658 = vrot.slane %v654, 4
        %v659 = vsel %vm392, %v655, %v656
        %vm660 = vcmask 924672
        %v661 = vsel %vm660, %v648, %v659
        %v662 = vsel %vm392, %v657, %v658
        %v663 = vsel %vm660, %v652, %v662
        %666 = vst [vmem:[#allocation3 + $0x60] sm:$0xff] %v661
        %667 = vst [vmem:[#allocation3 + $0x68] sm:$0xff] %v663
        %v668 = vld [vmem:[#allocation2 + $0x4] sm:$0xff]
        %v669 = vld [vmem:[#allocation2 + $0xc] sm:$0xf]
        %v670 = vld [vmem:[#allocation2 + $0x14] sm:$0xff]
        %v671 = vld [vmem:[#allocation2 + $0x1c] sm:$0xf]
        %676 = vrot.lane.b32.xlu0 %v668, 112
        %v677 = vpop.permute.xlu0 %676
        %678 = vrot.lane.b32.xlu0 %v669, 112
        %v679 = vpop.permute.xlu0 %678
        %680 = vrot.lane.b32.xlu0 %v670, 112
        %v681 = vpop.permute.xlu0 %680
        %682 = vrot.lane.b32.xlu0 %v671, 112
        %v683 = vpop.permute.xlu0 %682
        %v684 = vrot.slane %v677, 4
        %v685 = vrot.slane %v679, 4
        %v686 = vrot.slane %v681, 4
        %v687 = vrot.slane %v683, 4
        %v688 = vsel %vm392, %v684, %v685
        %vm689 = vcmask 916480
        %v690 = vsel %vm689, %v677, %v688
        %v691 = vsel %vm392, %v686, %v687
        %v692 = vsel %vm689, %v681, %v691
        %695 = vst [vmem:[#allocation3 + $0x70] sm:$0xff] %v690
        %696 = vst [vmem:[#allocation3 + $0x78] sm:$0xff] %v692
        %v697 = vld [vmem:[#allocation2 + $0x4] sm:$0xff]
        %v698 = vld [vmem:[#allocation2 + $0xc] sm:$0xf]
        %v699 = vld [vmem:[#allocation2 + $0x14] sm:$0xff]
        %v700 = vld [vmem:[#allocation2 + $0x1c] sm:$0xf]
        %v701 = vunpack.c.l.bf16 %v697
        %v702 = vunpack.c.h.bf16 %v697
        %v703 = vunpack.c.l.bf16 %v698
        %v704 = vunpack.c.l.bf16 %v699
        %v705 = vunpack.c.h.bf16 %v699
        %v706 = vunpack.c.l.bf16 %v700
        %707 = vrot.lane.b32.xlu0 %v454, 17
        %v708 = vpop.permute.xlu0 %707
        %709 = vrot.lane.b32.xlu0 %v455, 17
        %v710 = vpop.permute.xlu0 %709
        %vm711 = vcmask 138240
        %v712 = vsel %vm711, %v708, %v710
        %v716 = vmul.f32 %v701, %v708
        %v717 = vmul.f32 %v702, %v712
        %v718 = vmul.f32 %v703, %v710
        %v719 = vmul.f32 %v704, %v708
        %v720 = vmul.f32 %v705, %v712
        %v721 = vmul.f32 %v706, %v710
        %v722 = vpack.c.bf16 %v717, %v716
        %v723 = vpack.c.bf16 %v718, %v718
        %v724 = vpack.c.bf16 %v720, %v719
        %v725 = vpack.c.bf16 %v721, %v721
        %730 = vrot.lane.b32.xlu0 %v722, 111
        %v731 = vpop.permute.xlu0 %730
        %732 = vrot.lane.b32.xlu0 %v723, 111
        %v733 = vpop.permute.xlu0 %732
        %734 = vrot.lane.b32.xlu0 %v724, 111
        %v735 = vpop.permute.xlu0 %734
        %736 = vrot.lane.b32.xlu0 %v725, 111
        %v737 = vpop.permute.xlu0 %736
        %v738 = vrot.slane %v731, 4
        %v739 = vrot.slane %v733, 4
        %v740 = vrot.slane %v735, 4
        %v741 = vrot.slane %v737, 4
        %v742 = vsel %vm392, %v738, %v739
        %vm743 = vcmask 908288
        %v744 = vsel %vm743, %v731, %v742
        %v745 = vsel %vm392, %v740, %v741
        %v746 = vsel %vm743, %v735, %v745
        %749 = vst [vmem:[#allocation3 + $0x80] sm:$0xff] %v744
        %750 = vst [vmem:[#allocation3 + $0x88] sm:$0xff] %v746
        %v751 = vld [vmem:[%s1] sm:$0xff]
        %v752 = vld [vmem:[#allocation3] sm:$0xff]
        %v753 = vld [vmem:[#allocation3 + $0x8] sm:$0xff]
        %v754 = vld [vmem:[#allocation3 + $0x10] sm:$0xff]
        %v755 = vld [vmem:[#allocation3 + $0x18] sm:$0xff]
        %v756 = vld [vmem:[#allocation3 + $0x20] sm:$0xff]
        %v757 = vld [vmem:[#allocation3 + $0x28] sm:$0xff]
        %v758 = vld [vmem:[#allocation3 + $0x30] sm:$0xff]
        %v759 = vld [vmem:[#allocation3 + $0x38] sm:$0xff]
        %v760 = vld [vmem:[#allocation3 + $0x40] sm:$0xff]
        %v761 = vld [vmem:[#allocation3 + $0x48] sm:$0xff]
        %v762 = vld [vmem:[#allocation3 + $0x50] sm:$0xff]
        %v763 = vld [vmem:[#allocation3 + $0x58] sm:$0xff]
        %v764 = vld [vmem:[#allocation3 + $0x60] sm:$0xff]
        %v765 = vld [vmem:[#allocation3 + $0x68] sm:$0xff]
        %v766 = vld [vmem:[#allocation3 + $0x70] sm:$0xff]
        %v767 = vld [vmem:[#allocation3 + $0x78] sm:$0xff]
        %v768 = vld [vmem:[#allocation3 + $0x80] sm:$0xff]
        %v769 = vld [vmem:[#allocation3 + $0x88] sm:$0xff]
        %v770 = vld [vmem:[%s2] sm:$0xff]
        %772 = vset.pattern.permute.xlu0 0
        %773 = vperm.xlu0 %772, %v770
        %v774 = vpop.permute.xlu0 %773
        %v777 = vunpack.c.l.b16 %v751
        %v778 = vunpack.c.h.b16 %v751
        %v779 = vpack.c.b16 %v777, %v777
        %v780 = vpack.c.b16 %v778, %v778
        %v800 = vunpack.c.l.b16 %v752
        %v801 = vunpack.c.h.b16 %v752
        %v802 = vunpack.c.l.b16 %v753
        %v803 = vunpack.c.h.b16 %v753
        %v804 = vunpack.c.l.b16 %v754
        %v805 = vunpack.c.h.b16 %v754
        %v806 = vunpack.c.l.b16 %v755
        %v807 = vunpack.c.h.b16 %v755
        %v808 = vunpack.c.l.b16 %v756
        %v809 = vunpack.c.h.b16 %v756
        %v810 = vunpack.c.l.b16 %v757
        %v811 = vunpack.c.h.b16 %v757
        %v812 = vunpack.c.l.b16 %v758
        %v813 = vunpack.c.h.b16 %v758
        %v814 = vunpack.c.l.b16 %v759
        %v815 = vunpack.c.h.b16 %v759
        %v816 = vunpack.c.l.b16 %v760
        %v817 = vunpack.c.h.b16 %v760
        %v818 = vunpack.c.l.b16 %v761
        %v819 = vunpack.c.h.b16 %v761
        %v820 = vunpack.c.l.b16 %v762
        %v821 = vunpack.c.h.b16 %v762
        %v822 = vunpack.c.l.b16 %v763
        %v823 = vunpack.c.h.b16 %v763
        %v824 = vunpack.c.l.b16 %v764
        %v825 = vunpack.c.h.b16 %v764
        %v826 = vunpack.c.l.b16 %v765
        %v827 = vunpack.c.h.b16 %v765
        %v828 = vunpack.c.l.b16 %v766
        %v829 = vunpack.c.h.b16 %v766
        %v830 = vunpack.c.l.b16 %v767
        %v831 = vunpack.c.h.b16 %v767
        %v832 = vunpack.c.l.b16 %v768
        %v833 = vunpack.c.h.b16 %v768
        %v834 = vunpack.c.l.b16 %v769
        %v835 = vunpack.c.h.b16 %v769
        %v836 = vpack.c.b16 %v802, %v800
        %v837 = vpack.c.b16 %v803, %v801
        %v838 = vpack.c.b16 %v806, %v804
        %v839 = vpack.c.b16 %v807, %v805
        %v840 = vpack.c.b16 %v810, %v808
        %v841 = vpack.c.b16 %v811, %v809
        %v842 = vpack.c.b16 %v814, %v812
        %v843 = vpack.c.b16 %v815, %v813
        %v844 = vpack.c.b16 %v818, %v816
        %v845 = vpack.c.b16 %v819, %v817
        %v846 = vpack.c.b16 %v822, %v820
        %v847 = vpack.c.b16 %v823, %v821
        %v848 = vpack.c.b16 %v826, %v824
        %v849 = vpack.c.b16 %v827, %v825
        %v850 = vpack.c.b16 %v830, %v828
        %v851 = vpack.c.b16 %v831, %v829
        %v852 = vpack.c.b16 %v834, %v832
        %v853 = vpack.c.b16 %v835, %v833
        %vm872 = vcmask 130048
        %v874 = vsel %vm872, %v780, 0
        %876 = vmatpush.bf16.msra.mxu0 %v850
        %877 = vmatpush.bf16.msra.mxu0 %v848
        %878 = vmatpush.bf16.msra.mxu0 %v846
        %879 = vmatpush.bf16.msra.mxu0 %v844
        %880 = vmatpush.bf16.msra.mxu0 %v842
        %881 = vmatpush.bf16.msra.mxu0 %v840
        %882 = vmatpush.bf16.msra.mxu0 %v838
        %883 = vmatpush.bf16.msra.mxu0 %v836
        %884 = vmatmul.bf16.gmra.mxu0 %v779
        %v885 = vpop.f32.mrf.mxu0
        %v886 = vadd.f32 %v774, %v885
        %v887 = vpop.f32.mrf.mxu0
        %888 = vdwg.mxu0
        %889 = vmatpush.bf16.msra.mxu0 0
        %890 = vmatpush.bf16.msra.mxu0 0
        %891 = vmatpush.bf16.msra.mxu0 0
        %892 = vmatpush.bf16.msra.mxu0 0
        %893 = vmatpush.bf16.msra.mxu0 0
        %894 = vmatpush.bf16.msra.mxu0 0
        %895 = vmatpush.bf16.msra.mxu0 0
        %896 = vmatpush.bf16.msra.mxu0 %v852
        %897 = vmatmul.bf16.gmra.mxu0 %v874
        %v898 = vpop.f32.mrf.mxu0
        %v899 = vadd.f32 %v886, %v898
        %v900 = vpop.f32.mrf.mxu0
        %901 = vdwg.mxu0
        %902 = vmatpush.bf16.msra.mxu0 %v851
        %903 = vmatpush.bf16.msra.mxu0 %v849
        %904 = vmatpush.bf16.msra.mxu0 %v847
        %905 = vmatpush.bf16.msra.mxu0 %v845
        %906 = vmatpush.bf16.msra.mxu0 %v843
        %907 = vmatpush.bf16.msra.mxu0 %v841
        %908 = vmatpush.bf16.msra.mxu0 %v839
        %909 = vmatpush.bf16.msra.mxu0 %v837
        %910 = vmatmul.bf16.gmra.mxu0 %v779
        %v911 = vpop.f32.mrf.mxu0
        %v912 = vadd.f32 %v774, %v911
        %v913 = vpop.f32.mrf.mxu0
        %914 = vdwg.mxu0
        %915 = vmatpush.bf16.msra.mxu0 0
        %916 = vmatpush.bf16.msra.mxu0 0
        %917 = vmatpush.bf16.msra.mxu0 0
        %918 = vmatpush.bf16.msra.mxu0 0
        %919 = vmatpush.bf16.msra.mxu0 0
        %920 = vmatpush.bf16.msra.mxu0 0
        %921 = vmatpush.bf16.msra.mxu0 0
        %922 = vmatpush.bf16.msra.mxu0 %v853
        %923 = vmatmul.bf16.gmra.mxu0 %v874
        %v924 = vpop.f32.mrf.mxu0
        %v925 = vadd.f32 %v912, %v924
        %v926 = vpop.f32.mrf.mxu0
        %927 = vdwg.mxu0
        %v928 = vmax.f32 %v899, 0.0
        %v929 = vmax.f32 %v925, 0.0
        %v930 = vpack.c.bf16 %v929, %v928
        %931 = vst [vmem:[#allocation2 + $0x4] sm:$0xff] %v930
        %v932 = vld [vmem:[#allocation2] sm:$0xff]
        %v933 = vld [vmem:[#allocation2 + $0x8] sm:$0xf]
        %v934 = vld [vmem:[#allocation2 + $0x10] sm:$0xff]
        %v935 = vld [vmem:[#allocation2 + $0x18] sm:$0xf]
        %v936 = vunpack.c.l.bf16 %v932
        %v937 = vunpack.c.h.bf16 %v932
        %v938 = vunpack.c.l.bf16 %v933
        %v939 = vunpack.c.l.bf16 %v934
        %v940 = vunpack.c.h.bf16 %v934
        %v941 = vunpack.c.l.bf16 %v935
        %v942 = vmul.f32 %v936, %v358
        %v943 = vmul.f32 %v937, %v362
        %v944 = vmul.f32 %v938, %v360
        %v945 = vmul.f32 %v939, %v358
        %v946 = vmul.f32 %v940, %v362
        %v947 = vmul.f32 %v941, %v360
        %v948 = vpack.c.bf16 %v943, %v942
        %v949 = vpack.c.bf16 %v944, %v944
        %v950 = vpack.c.bf16 %v946, %v945
        %v951 = vpack.c.bf16 %v947, %v947
        %956 = vrot.lane.b32.xlu0 %v948, 17
        %v957 = vpop.permute.xlu0 %956
        %958 = vrot.lane.b32.xlu0 %v949, 17
        %v959 = vpop.permute.xlu0 %958
        %960 = vrot.lane.b32.xlu0 %v950, 17
        %v961 = vpop.permute.xlu0 %960
        %962 = vrot.lane.b32.xlu0 %v951, 17
        %v963 = vpop.permute.xlu0 %962
        %v964 = vrot.slane %v957, 4
        %v965 = vrot.slane %v959, 4
        %v966 = vrot.slane %v961, 4
        %v967 = vrot.slane %v963, 4
        %v968 = vsel %vm392, %v964, %v965
        %v969 = vsel %vm394, %v957, %v968
        %v970 = vsel %vm392, %v966, %v967
        %v971 = vsel %vm394, %v961, %v970
        %974 = vst [vmem:[#allocation3] sm:$0xff] %v969
        %975 = vst [vmem:[#allocation3 + $0x8] sm:$0xff] %v971
        %v976 = vld [vmem:[#allocation2] sm:$0xff]
        %v977 = vld [vmem:[#allocation2 + $0x8] sm:$0xf]
        %v978 = vld [vmem:[#allocation2 + $0x10] sm:$0xff]
        %v979 = vld [vmem:[#allocation2 + $0x18] sm:$0xf]
        %984 = vrot.lane.b32.xlu0 %v976, 16
        %v985 = vpop.permute.xlu0 %984
        %986 = vrot.lane.b32.xlu0 %v977, 16
        %v987 = vpop.permute.xlu0 %986
        %988 = vrot.lane.b32.xlu0 %v978, 16
        %v989 = vpop.permute.xlu0 %988
        %990 = vrot.lane.b32.xlu0 %v979, 16
        %v991 = vpop.permute.xlu0 %990
        %v992 = vrot.slane %v985, 4
        %v993 = vrot.slane %v987, 4
        %v994 = vrot.slane %v989, 4
        %v995 = vrot.slane %v991, 4
        %v996 = vsel %vm392, %v992, %v993
        %v997 = vsel %vm423, %v985, %v996
        %v998 = vsel %vm392, %v994, %v995
        %v999 = vsel %vm423, %v989, %v998
        %1002 = vst [vmem:[#allocation3 + $0x10] sm:$0xff] %v997
        %1003 = vst [vmem:[#allocation3 + $0x18] sm:$0xff] %v999
        %v1004 = vld [vmem:[#allocation2] sm:$0xff]
        %v1005 = vld [vmem:[#allocation2 + $0x8] sm:$0xf]
        %v1006 = vld [vmem:[#allocation2 + $0x10] sm:$0xff]
        %v1007 = vld [vmem:[#allocation2 + $0x18] sm:$0xf]
        %v1008 = vunpack.c.l.bf16 %v1004
        %v1009 = vunpack.c.h.bf16 %v1004
        %v1010 = vunpack.c.l.bf16 %v1005
        %v1011 = vunpack.c.l.bf16 %v1006
        %v1012 = vunpack.c.h.bf16 %v1006
        %v1013 = vunpack.c.l.bf16 %v1007
        %v1014 = vmul.f32 %v1008, %v459
        %v1015 = vmul.f32 %v1009, %v463
        %v1016 = vmul.f32 %v1010, %v461
        %v1017 = vmul.f32 %v1011, %v459
        %v1018 = vmul.f32 %v1012, %v463
        %v1019 = vmul.f32 %v1013, %v461
        %v1020 = vpack.c.bf16 %v1015, %v1014
        %v1021 = vpack.c.bf16 %v1016, %v1016
        %v1022 = vpack.c.bf16 %v1018, %v1017
        %v1023 = vpack.c.bf16 %v1019, %v1019
        %1028 = vrot.lane.b32.xlu0 %v1020, 15
        %v1029 = vpop.permute.xlu0 %1028
        %1030 = vrot.lane.b32.xlu0 %v1021, 15
        %v1031 = vpop.permute.xlu0 %1030
        %1032 = vrot.lane.b32.xlu0 %v1022, 15
        %v1033 = vpop.permute.xlu0 %1032
        %1034 = vrot.lane.b32.xlu0 %v1023, 15
        %v1035 = vpop.permute.xlu0 %1034
        %v1036 = vrot.slane %v1029, 4
        %v1037 = vrot.slane %v1031, 4
        %v1038 = vrot.slane %v1033, 4
        %v1039 = vrot.slane %v1035, 4
        %v1040 = vsel %vm392, %v1036, %v1037
        %v1041 = vsel %vm494, %v1029, %v1040
        %v1042 = vsel %vm392, %v1038, %v1039
        %v1043 = vsel %vm494, %v1033, %v1042
        %1046 = vst [vmem:[#allocation3 + $0x20] sm:$0xff] %v1041
        %1047 = vst [vmem:[#allocation3 + $0x28] sm:$0xff] %v1043
        %v1048 = vld [vmem:[#allocation2] sm:$0xff]
        %v1049 = vld [vmem:[#allocation2 + $0x8] sm:$0xf]
        %v1050 = vld [vmem:[#allocation2 + $0x10] sm:$0xff]
        %v1051 = vld [vmem:[#allocation2 + $0x18] sm:$0xf]
        %v1052 = vunpack.c.l.bf16 %v1048
        %v1053 = vunpack.c.h.bf16 %v1048
        %v1054 = vunpack.c.l.bf16 %v1049
        %v1055 = vunpack.c.l.bf16 %v1050
        %v1056 = vunpack.c.h.bf16 %v1050
        %v1057 = vunpack.c.l.bf16 %v1051
        %v1058 = vmul.f32 %v1052, %v513
        %v1059 = vmul.f32 %v1053, %v517
        %v1060 = vmul.f32 %v1054, %v515
        %v1061 = vmul.f32 %v1055, %v513
        %v1062 = vmul.f32 %v1056, %v517
        %v1063 = vmul.f32 %v1057, %v515
        %v1064 = vpack.c.bf16 %v1059, %v1058
        %v1065 = vpack.c.bf16 %v1060, %v1060
        %v1066 = vpack.c.bf16 %v1062, %v1061
        %v1067 = vpack.c.bf16 %v1063, %v1063
        %1072 = vrot.lane.b32.xlu0 %v1064, 1
        %v1073 = vpop.permute.xlu0 %1072
        %1074 = vrot.lane.b32.xlu0 %v1065, 1
        %v1075 = vpop.permute.xlu0 %1074
        %1076 = vrot.lane.b32.xlu0 %v1066, 1
        %v1077 = vpop.permute.xlu0 %1076
        %1078 = vrot.lane.b32.xlu0 %v1067, 1
        %v1079 = vpop.permute.xlu0 %1078
        %v1080 = vrot.slane %v1073, 4
        %v1081 = vrot.slane %v1075, 4
        %v1082 = vrot.slane %v1077, 4
        %v1083 = vrot.slane %v1079, 4
        %v1084 = vsel %vm392, %v1080, %v1081
        %v1085 = vsel %vm548, %v1073, %v1084
        %v1086 = vsel %vm392, %v1082, %v1083
        %v1087 = vsel %vm548, %v1077, %v1086
        %1090 = vst [vmem:[#allocation3 + $0x30] sm:$0xff] %v1085
        %1091 = vst [vmem:[#allocation3 + $0x38] sm:$0xff] %v1087
        %v1092 = vld [vmem:[#allocation2 + $0x4] sm:$0xff]
        %v1093 = vld [vmem:[#allocation2 + $0x14] sm:$0xff]
        %1094 = vst [vmem:[#allocation3 + $0x40] sm:$0xff] %v1092
        %1095 = vst [vmem:[#allocation3 + $0x48] sm:$0xff] %v1093
        %v1096 = vld [vmem:[#allocation2 + $0x4] sm:$0xff]
        %v1097 = vld [vmem:[#allocation2 + $0xc] sm:$0xf]
        %v1098 = vld [vmem:[#allocation2 + $0x14] sm:$0xff]
        %v1099 = vld [vmem:[#allocation2 + $0x1c] sm:$0xf]
        %v1100 = vunpack.c.l.bf16 %v1096
        %v1101 = vunpack.c.h.bf16 %v1096
        %v1102 = vunpack.c.l.bf16 %v1097
        %v1103 = vunpack.c.l.bf16 %v1098
        %v1104 = vunpack.c.h.bf16 %v1098
        %v1105 = vunpack.c.l.bf16 %v1099
        %v1106 = vmul.f32 %v1100, %v571
        %v1107 = vmul.f32 %v1101, %v575
        %v1108 = vmul.f32 %v1102, %v573
        %v1109 = vmul.f32 %v1103, %v571
        %v1110 = vmul.f32 %v1104, %v575
        %v1111 = vmul.f32 %v1105, %v573
        %v1112 = vpack.c.bf16 %v1107, %v1106
        %v1113 = vpack.c.bf16 %v1108, %v1108
        %v1114 = vpack.c.bf16 %v1110, %v1109
        %v1115 = vpack.c.bf16 %v1111, %v1111
        %1120 = vrot.lane.b32.xlu0 %v1112, 127
        %v1121 = vpop.permute.xlu0 %1120
        %1122 = vrot.lane.b32.xlu0 %v1113, 127
        %v1123 = vpop.permute.xlu0 %1122
        %1124 = vrot.lane.b32.xlu0 %v1114, 127
        %v1125 = vpop.permute.xlu0 %1124
        %1126 = vrot.lane.b32.xlu0 %v1115, 127
        %v1127 = vpop.permute.xlu0 %1126
        %v1128 = vrot.slane %v1121, 4
        %v1129 = vrot.slane %v1123, 4
        %v1130 = vrot.slane %v1125, 4
        %v1131 = vrot.slane %v1127, 4
        %v1132 = vsel %vm392, %v1128, %v1129
        %v1133 = vsel %vm606, %v1121, %v1132
        %v1134 = vsel %vm392, %v1130, %v1131
        %v1135 = vsel %vm606, %v1125, %v1134
        %1138 = vst [vmem:[#allocation3 + $0x50] sm:$0xff] %v1133
        %1139 = vst [vmem:[#allocation3 + $0x58] sm:$0xff] %v1135
        %v1140 = vld [vmem:[#allocation2 + $0x4] sm:$0xff]
        %v1141 = vld [vmem:[#allocation2 + $0xc] sm:$0xf]
        %v1142 = vld [vmem:[#allocation2 + $0x14] sm:$0xff]
        %v1143 = vld [vmem:[#allocation2 + $0x1c] sm:$0xf]
        %v1144 = vunpack.c.l.bf16 %v1140
        %v1145 = vunpack.c.h.bf16 %v1140
        %v1146 = vunpack.c.l.bf16 %v1141
        %v1147 = vunpack.c.l.bf16 %v1142
        %v1148 = vunpack.c.h.bf16 %v1142
        %v1149 = vunpack.c.l.bf16 %v1143
        %v1150 = vmul.f32 %v1144, %v625
        %v1151 = vmul.f32 %v1145, %v629
        %v1152 = vmul.f32 %v1146, %v627
        %v1153 = vmul.f32 %v1147, %v625
        %v1154 = vmul.f32 %v1148, %v629
        %v1155 = vmul.f32 %v1149, %v627
        %v1156 = vpack.c.bf16 %v1151, %v1150
        %v1157 = vpack.c.bf16 %v1152, %v1152
        %v1158 = vpack.c.bf16 %v1154, %v1153
        %v1159 = vpack.c.bf16 %v1155, %v1155
        %1164 = vrot.lane.b32.xlu0 %v1156, 113
        %v1165 = vpop.permute.xlu0 %1164
        %1166 = vrot.lane.b32.xlu0 %v1157, 113
        %v1167 = vpop.permute.xlu0 %1166
        %1168 = vrot.lane.b32.xlu0 %v1158, 113
        %v1169 = vpop.permute.xlu0 %1168
        %1170 = vrot.lane.b32.xlu0 %v1159, 113
        %v1171 = vpop.permute.xlu0 %1170
        %v1172 = vrot.slane %v1165, 4
        %v1173 = vrot.slane %v1167, 4
        %v1174 = vrot.slane %v1169, 4
        %v1175 = vrot.slane %v1171, 4
        %v1176 = vsel %vm392, %v1172, %v1173
        %v1177 = vsel %vm660, %v1165, %v1176
        %v1178 = vsel %vm392, %v1174, %v1175
        %v1179 = vsel %vm660, %v1169, %v1178
        %1182 = vst [vmem:[#allocation3 + $0x60] sm:$0xff] %v1177
        %1183 = vst [vmem:[#allocation3 + $0x68] sm:$0xff] %v1179
        %v1184 = vld [vmem:[#allocation2 + $0x4] sm:$0xff]
        %v1185 = vld [vmem:[#allocation2 + $0xc] sm:$0xf]
        %v1186 = vld [vmem:[#allocation2 + $0x14] sm:$0xff]
        %v1187 = vld [vmem:[#allocation2 + $0x1c] sm:$0xf]
        %1192 = vrot.lane.b32.xlu0 %v1184, 112
        %v1193 = vpop.permute.xlu0 %1192
        %1194 = vrot.lane.b32.xlu0 %v1185, 112
        %v1195 = vpop.permute.xlu0 %1194
        %1196 = vrot.lane.b32.xlu0 %v1186, 112
        %v1197 = vpop.permute.xlu0 %1196
        %1198 = vrot.lane.b32.xlu0 %v1187, 112
        %v1199 = vpop.permute.xlu0 %1198
        %v1200 = vrot.slane %v1193, 4
        %v1201 = vrot.slane %v1195, 4
        %v1202 = vrot.slane %v1197, 4
        %v1203 = vrot.slane %v1199, 4
        %v1204 = vsel %vm392, %v1200, %v1201
        %v1205 = vsel %vm689, %v1193, %v1204
        %v1206 = vsel %vm392, %v1202, %v1203
        %v1207 = vsel %vm689, %v1197, %v1206
        %1210 = vst [vmem:[#allocation3 + $0x70] sm:$0xff] %v1205
        %1211 = vst [vmem:[#allocation3 + $0x78] sm:$0xff] %v1207
        %v1212 = vld [vmem:[#allocation2 + $0x4] sm:$0xff]
        %v1213 = vld [vmem:[#allocation2 + $0xc] sm:$0xf]
        %v1214 = vld [vmem:[#allocation2 + $0x14] sm:$0xff]
        %v1215 = vld [vmem:[#allocation2 + $0x1c] sm:$0xf]
        %v1216 = vunpack.c.l.bf16 %v1212
        %v1217 = vunpack.c.h.bf16 %v1212
        %v1218 = vunpack.c.l.bf16 %v1213
        %v1219 = vunpack.c.l.bf16 %v1214
        %v1220 = vunpack.c.h.bf16 %v1214
        %v1221 = vunpack.c.l.bf16 %v1215
        %v1222 = vmul.f32 %v1216, %v708
        %v1223 = vmul.f32 %v1217, %v712
        %v1224 = vmul.f32 %v1218, %v710
        %v1225 = vmul.f32 %v1219, %v708
        %v1226 = vmul.f32 %v1220, %v712
        %v1227 = vmul.f32 %v1221, %v710
        %v1228 = vpack.c.bf16 %v1223, %v1222
        %v1229 = vpack.c.bf16 %v1224, %v1224
        %v1230 = vpack.c.bf16 %v1226, %v1225
        %v1231 = vpack.c.bf16 %v1227, %v1227
        %1236 = vrot.lane.b32.xlu0 %v1228, 111
        %v1237 = vpop.permute.xlu0 %1236
        %1238 = vrot.lane.b32.xlu0 %v1229, 111
        %v1239 = vpop.permute.xlu0 %1238
        %1240 = vrot.lane.b32.xlu0 %v1230, 111
        %v1241 = vpop.permute.xlu0 %1240
        %1242 = vrot.lane.b32.xlu0 %v1231, 111
        %v1243 = vpop.permute.xlu0 %1242
        %v1244 = vrot.slane %v1237, 4
        %v1245 = vrot.slane %v1239, 4
        %v1246 = vrot.slane %v1241, 4
        %v1247 = vrot.slane %v1243, 4
        %v1248 = vsel %vm392, %v1244, %v1245
        %v1249 = vsel %vm743, %v1237, %v1248
        %v1250 = vsel %vm392, %v1246, %v1247
        %v1251 = vsel %vm743, %v1241, %v1250
        %1254 = vst [vmem:[#allocation3 + $0x80] sm:$0xff] %v1249
        %1255 = vst [vmem:[#allocation3 + $0x88] sm:$0xff] %v1251
        %v1256 = vld [vmem:[%s3] sm:$0xff]
        %v1257 = vld [vmem:[#allocation3] sm:$0xff]
        %v1258 = vld [vmem:[#allocation3 + $0x8] sm:$0xff]
        %v1259 = vld [vmem:[#allocation3 + $0x10] sm:$0xff]
        %v1260 = vld [vmem:[#allocation3 + $0x18] sm:$0xff]
        %v1261 = vld [vmem:[#allocation3 + $0x20] sm:$0xff]
        %v1262 = vld [vmem:[#allocation3 + $0x28] sm:$0xff]
        %v1263 = vld [vmem:[#allocation3 + $0x30] sm:$0xff]
        %v1264 = vld [vmem:[#allocation3 + $0x38] sm:$0xff]
        %v1265 = vld [vmem:[#allocation3 + $0x40] sm:$0xff]
        %v1266 = vld [vmem:[#allocation3 + $0x48] sm:$0xff]
        %v1267 = vld [vmem:[#allocation3 + $0x50] sm:$0xff]
        %v1268 = vld [vmem:[#allocation3 + $0x58] sm:$0xff]
        %v1269 = vld [vmem:[#allocation3 + $0x60] sm:$0xff]
        %v1270 = vld [vmem:[#allocation3 + $0x68] sm:$0xff]
        %v1271 = vld [vmem:[#allocation3 + $0x70] sm:$0xff]
        %v1272 = vld [vmem:[#allocation3 + $0x78] sm:$0xff]
        %v1273 = vld [vmem:[#allocation3 + $0x80] sm:$0xff]
        %v1274 = vld [vmem:[#allocation3 + $0x88] sm:$0xff]
        %v1275 = vld [vmem:[%s4] sm:$0xff]
        %1277 = vset.pattern.permute.xlu0 0
        %1278 = vperm.xlu0 %1277, %v1275
        %v1279 = vpop.permute.xlu0 %1278
        %v1282 = vunpack.c.l.b16 %v1256
        %v1283 = vunpack.c.h.b16 %v1256
        %v1284 = vpack.c.b16 %v1282, %v1282
        %v1285 = vpack.c.b16 %v1283, %v1283
        %v1305 = vunpack.c.l.b16 %v1257
        %v1306 = vunpack.c.h.b16 %v1257
        %v1307 = vunpack.c.l.b16 %v1258
        %v1308 = vunpack.c.h.b16 %v1258
        %v1309 = vunpack.c.l.b16 %v1259
        %v1310 = vunpack.c.h.b16 %v1259
        %v1311 = vunpack.c.l.b16 %v1260
        %v1312 = vunpack.c.h.b16 %v1260
        %v1313 = vunpack.c.l.b16 %v1261
        %v1314 = vunpack.c.h.b16 %v1261
        %v1315 = vunpack.c.l.b16 %v1262
        %v1316 = vunpack.c.h.b16 %v1262
        %v1317 = vunpack.c.l.b16 %v1263
        %v1318 = vunpack.c.h.b16 %v1263
        %v1319 = vunpack.c.l.b16 %v1264
        %v1320 = vunpack.c.h.b16 %v1264
        %v1321 = vunpack.c.l.b16 %v1265
        %v1322 = vunpack.c.h.b16 %v1265
        %v1323 = vunpack.c.l.b16 %v1266
        %v1324 = vunpack.c.h.b16 %v1266
        %v1325 = vunpack.c.l.b16 %v1267
        %v1326 = vunpack.c.h.b16 %v1267
        %v1327 = vunpack.c.l.b16 %v1268
        %v1328 = vunpack.c.h.b16 %v1268
        %v1329 = vunpack.c.l.b16 %v1269
        %v1330 = vunpack.c.h.b16 %v1269
        %v1331 = vunpack.c.l.b16 %v1270
        %v1332 = vunpack.c.h.b16 %v1270
        %v1333 = vunpack.c.l.b16 %v1271
        %v1334 = vunpack.c.h.b16 %v1271
        %v1335 = vunpack.c.l.b16 %v1272
        %v1336 = vunpack.c.h.b16 %v1272
        %v1337 = vunpack.c.l.b16 %v1273
        %v1338 = vunpack.c.h.b16 %v1273
        %v1339 = vunpack.c.l.b16 %v1274
        %v1340 = vunpack.c.h.b16 %v1274
        %v1341 = vpack.c.b16 %v1307, %v1305
        %v1342 = vpack.c.b16 %v1308, %v1306
        %v1343 = vpack.c.b16 %v1311, %v1309
        %v1344 = vpack.c.b16 %v1312, %v1310
        %v1345 = vpack.c.b16 %v1315, %v1313
        %v1346 = vpack.c.b16 %v1316, %v1314
        %v1347 = vpack.c.b16 %v1319, %v1317
        %v1348 = vpack.c.b16 %v1320, %v1318
        %v1349 = vpack.c.b16 %v1323, %v1321
        %v1350 = vpack.c.b16 %v1324, %v1322
        %v1351 = vpack.c.b16 %v1327, %v1325
        %v1352 = vpack.c.b16 %v1328, %v1326
        %v1353 = vpack.c.b16 %v1331, %v1329
        %v1354 = vpack.c.b16 %v1332, %v1330
        %v1355 = vpack.c.b16 %v1335, %v1333
        %v1356 = vpack.c.b16 %v1336, %v1334
        %v1357 = vpack.c.b16 %v1339, %v1337
        %v1358 = vpack.c.b16 %v1340, %v1338
        %v1378 = vsel %vm872, %v1285, 0
        %1380 = vmatpush.bf16.msra.mxu0 %v1355
        %1381 = vmatpush.bf16.msra.mxu0 %v1353
        %1382 = vmatpush.bf16.msra.mxu0 %v1351
        %1383 = vmatpush.bf16.msra.mxu0 %v1349
        %1384 = vmatpush.bf16.msra.mxu0 %v1347
        %1385 = vmatpush.bf16.msra.mxu0 %v1345
        %1386 = vmatpush.bf16.msra.mxu0 %v1343
        %1387 = vmatpush.bf16.msra.mxu0 %v1341
        %1388 = vmatmul.bf16.gmra.mxu0 %v1284
        %v1389 = vpop.f32.mrf.mxu0
        %v1390 = vadd.f32 %v1279, %v1389
        %v1391 = vpop.f32.mrf.mxu0
        %1392 = vdwg.mxu0
        %1393 = vmatpush.bf16.msra.mxu0 0
        %1394 = vmatpush.bf16.msra.mxu0 0
        %1395 = vmatpush.bf16.msra.mxu0 0
        %1396 = vmatpush.bf16.msra.mxu0 0
        %1397 = vmatpush.bf16.msra.mxu0 0
        %1398 = vmatpush.bf16.msra.mxu0 0
        %1399 = vmatpush.bf16.msra.mxu0 0
        %1400 = vmatpush.bf16.msra.mxu0 %v1357
        %1401 = vmatmul.bf16.gmra.mxu0 %v1378
        %v1402 = vpop.f32.mrf.mxu0
        %v1403 = vadd.f32 %v1390, %v1402
        %v1404 = vpop.f32.mrf.mxu0
        %1405 = vdwg.mxu0
        %1406 = vmatpush.bf16.msra.mxu0 %v1356
        %1407 = vmatpush.bf16.msra.mxu0 %v1354
        %1408 = vmatpush.bf16.msra.mxu0 %v1352
        %1409 = vmatpush.bf16.msra.mxu0 %v1350
        %1410 = vmatpush.bf16.msra.mxu0 %v1348
        %1411 = vmatpush.bf16.msra.mxu0 %v1346
        %1412 = vmatpush.bf16.msra.mxu0 %v1344
        %1413 = vmatpush.bf16.msra.mxu0 %v1342
        %1414 = vmatmul.bf16.gmra.mxu0 %v1284
        %v1415 = vpop.f32.mrf.mxu0
        %v1416 = vadd.f32 %v1279, %v1415
        %v1417 = vpop.f32.mrf.mxu0
        %1418 = vdwg.mxu0
        %1419 = vmatpush.bf16.msra.mxu0 0
        %1420 = vmatpush.bf16.msra.mxu0 0
        %1421 = vmatpush.bf16.msra.mxu0 0
        %1422 = vmatpush.bf16.msra.mxu0 0
        %1423 = vmatpush.bf16.msra.mxu0 0
        %1424 = vmatpush.bf16.msra.mxu0 0
        %1425 = vmatpush.bf16.msra.mxu0 0
        %1426 = vmatpush.bf16.msra.mxu0 %v1358
        %1427 = vmatmul.bf16.gmra.mxu0 %v1378
        %v1428 = vpop.f32.mrf.mxu0
        %v1429 = vadd.f32 %v1416, %v1428
        %v1430 = vpop.f32.mrf.mxu0
        %1431 = vdwg.mxu0
        %v1432 = vld [vmem:[%s6] sm:$0xf]
        %v1433 = vld [vmem:[%s303] sm:$0xf]
        %v1434 = vld [vmem:[%s7] sm:$0xff]
        %1436 = vset.pattern.permute.xlu0 0
        %1437 = vperm.xlu0 %1436, %v1434
        %v1438 = vpop.permute.xlu0 %1437
        %1441 = vst [vmem:[#allocation1] ss:$4 sm:$0xff] %v1433
        %v1442 = vld.sshfl [vmem:[#allocation1] sm:$0xff pattern:$0x73625140]
        %v1443 = vld.sshfl [vmem:[#allocation1 + $0x8] sm:$0xff pattern:$0x73625140]
        %vm1444 = vcmask 31744
        %v1446 = vsel %vm1444, %v1432, 0
        %vm1448 = vcmask 1041408
        %v1449 = vsel %vm1448, %v1442, 0
        %v1451 = vsel %vm1448, %v1443, 0
        %1453 = vmatpush.bf16.msra.mxu0 0
        %1454 = vmatpush.bf16.msra.mxu0 0
        %1455 = vmatpush.bf16.msra.mxu0 0
        %1456 = vmatpush.bf16.msra.mxu0 0
        %1457 = vmatpush.bf16.msra.mxu0 0
        %1458 = vmatpush.bf16.msra.mxu0 0
        %1459 = vmatpush.bf16.msra.mxu0 0
        %1460 = vmatpush.bf16.msra.mxu0 %v1449
        %1461 = vmatmul.bf16.gmra.mxu0 %v1446
        %v1462 = vpop.f32.mrf.mxu0
        %v1463 = vadd.f32 %v1438, %v1462
        %v1464 = vpop.f32.mrf.mxu0
        %1465 = vdwg.mxu0
        %1466 = vmatpush.bf16.msra.mxu0 0
        %1467 = vmatpush.bf16.msra.mxu0 0
        %1468 = vmatpush.bf16.msra.mxu0 0
        %1469 = vmatpush.bf16.msra.mxu0 0
        %1470 = vmatpush.bf16.msra.mxu0 0
        %1471 = vmatpush.bf16.msra.mxu0 0
        %1472 = vmatpush.bf16.msra.mxu0 0
        %1473 = vmatpush.bf16.msra.mxu0 %v1451
        %1474 = vmatmul.bf16.gmra.mxu0 %v1446
        %v1475 = vpop.f32.mrf.mxu0
        %v1476 = vadd.f32 %v1438, %v1475
        %v1477 = vpop.f32.mrf.mxu0
        %1478 = vdwg.mxu0
        %v1479 = vadd.f32 %v1403, %v1463
        %v1480 = vadd.f32 %v1429, %v1476
        %v1481 = vmax.f32 %v1479, 0.0
        %v1482 = vmax.f32 %v1480, 0.0
        %1483 = vst [vmem:[%s298] sm:$0xff] %v1481
        %1484 = vst [vmem:[%s298 + $0x8] sm:$0xff] %v1482
        %s1485 = sand.u32 %s203, 1
        %s1486 = scalar_lea.sflag [#allocation5], %s1485
        %s1487 = sand.u32 %s203, 1
        %s1488 = smul.addr %s1487, 16
        %s1489 = scalar_lea.vmem [#allocation4], %s1488
        // Predicated region
        $region53: #{tpu_custom_call.1} parent=51 // pred_check
          %p1490 = pneg %p213
        $region54: #{tpu_custom_call.1} parent=51 // pred_check_branch
          %1492 = sbr.rel (%p1490) target = $region56
        $region55: #{tpu_custom_call.1} parent=51 // pred_region
          %1494 = vsyncadd %s1486, 0
          %s1495 = smul.addr %s22, 2
          %s1496 = smul.addr %s1495, 8
          %s1497 = scalar_lea.hbm %s8, %s1496
          %s1499 = sshll.u32 %s1489, 4
          %s1500 = int_to_ptr.vmem [resolvable:$true] %s1499
          %s1501 = sshll.u32 %s1497, 4
          %s1502 = int_to_ptr.hbm [resolvable:$true] %s1501
          %1504 = dma.vmem_to_hbm [thread:$0]  %s1500, 256, %s1502, %s1486
        $region56: #{tpu_custom_call.1} parent=51 // pred_fallthru
          _
      $region52: #{tpu_custom_call.1} parent=5 // pred_fallthru
        _
      %p1505 = scmp.le.s32.totalorder 2, %s17
      // Predicated region
      $region57: #{tpu_custom_call.1} parent=5 // pred_check
        %p1506 = pneg %p1505
      $region58: #{tpu_custom_call.1} parent=5 // pred_check_branch
        %1508 = sbr.rel (%p1506) target = $region60
      $region59: #{tpu_custom_call.1} parent=5 // pred_region
        %s1509 = ssub.s32 %s17, 2
        // Predicated region
        $region61: #{tpu_custom_call.1} parent=59 // pred_check
          %p1510 = pneg %p219
        $region62: #{tpu_custom_call.1} parent=59 // pred_check_branch
          %1512 = sbr.rel (%p1510) target = $region64
        $region63: #{tpu_custom_call.1} parent=59 // pred_region
          %s1513 = sand.u32 %s204, 1
          %s1514 = scalar_lea.sflag [#allocation5], %s1513
          %s1515 = sand.u32 %s204, 1
          %s1516 = smul.addr %s1515, 16
          %s1517 = scalar_lea.vmem [#allocation4], %s1516
          %1519 = dma.done %s1514, 256
        $region64: #{tpu_custom_call.1} parent=59 // pred_fallthru
          _
      $region60: #{tpu_custom_call.1} parent=5 // pred_fallthru
        _
    $region6: #{tpu_custom_call.1} parent=1 // loop_footer
      %s21 = sadd.s32 1, %s17
    $region7: #{tpu_custom_call.1} parent=1 // loop_footer_branch
      %16 = sbr.rel target = $region3
    $region8: #{tpu_custom_call.1} parent=1 // loop_exit
      _
    %1520 = vsyncpa [#allocation5], 1
    %s1521 = scalar_lea.sflag [#allocation5], 1
    %1522 = vsyncpa %s1521, 1

</llo_original>
